<compile_context>
chip_gen: v7x
topology: tpu7x:2x2x1
jax: 0.10.0
libtpu: 0.0.40
codegen_flags: <defaults>
</compile_context>

<pallas_src>
import jax
import jax.numpy as jnp
from jax.experimental import pallas as pl
from jax.experimental.pallas import tpu as pltpu

BN_EPS = 1e-5
LANE = 128


def _round_up(n: int, m: int) -> int:
    return (n + m - 1) // m * m


def encoder_kernel(x_ref,
                   w1_ref, g1_ref, be1_ref,
                   g2_ref, be2_ref,
                   g3_ref, be3_ref,
                   bh_ref,
                   w2_hbm, w3_hbm, wh_hbm,
                   out_ref,
                   w2_v, w3_v, wh_v, sem):
    # Kick off DMAs for the later-layer weights immediately; they overlap with the
    # layer-1 matmul + BN below and are waited on only right before use.
    cp2 = pltpu.make_async_copy(w2_hbm, w2_v, sem.at[0])
    cp3 = pltpu.make_async_copy(w3_hbm, w3_v, sem.at[1])
    cph = pltpu.make_async_copy(wh_hbm, wh_v, sem.at[2])
    cp2.start()
    cp3.start()
    cph.start()

    def bn_relu(z, g_ref, be_ref):
        # BatchNorm1d (training mode, biased variance), two-pass for numerical safety,
        # folded into one scale/shift; rsqrt goes to the EUP slot.
        mean = jnp.mean(z, axis=0, keepdims=True)
        centered = z - mean
        var = jnp.mean(centered * centered, axis=0, keepdims=True)
        scale = g_ref[...] * jax.lax.rsqrt(var + BN_EPS)
        shift = be_ref[...] - mean * scale
        # normalize + affine + ReLU + bf16 repack in a single elementwise pass.
        return jnp.maximum(z * scale + shift, 0.0).astype(jnp.bfloat16)

    # Layer 1 (weights auto-DMA'd by Pallas; hidden bias exactly cancelled by BN mean).
    z1 = jnp.dot(x_ref[...], w1_ref[...], preferred_element_type=jnp.float32)
    h1 = bn_relu(z1, g1_ref, be1_ref)

    # Layer 2 (wait on its weight DMA only now).
    cp2.wait()
    z2 = jnp.dot(h1, w2_v[...], preferred_element_type=jnp.float32)
    h2 = bn_relu(z2, g2_ref, be2_ref)

    # Layer 3.
    cp3.wait()
    z3 = jnp.dot(h2, w3_v[...], preferred_element_type=jnp.float32)
    h3 = bn_relu(z3, g3_ref, be3_ref)

    # Fused mu/logvar head: one matmul, 128-lane-wide output -> unmasked stores.
    cph.wait()
    out_ref[...] = (jnp.dot(h3, wh_v[...], preferred_element_type=jnp.float32)
                    + bh_ref[...])


def prepare_params(params, input_size=784):
    """One-time weight prep (pad + bf16 cast + head fusion), hoisted out of the forward path."""
    K_pad = _round_up(input_size, LANE)
    out_size = params["w_mu"].shape[1]
    head_pad = _round_up(2 * out_size, LANE)

    w1_p = jnp.pad(params["w1"], ((0, K_pad - input_size), (0, 0))).astype(jnp.bfloat16)
    w2_p = params["w2"].astype(jnp.bfloat16)
    w3_p = params["w3"].astype(jnp.bfloat16)
    w_head = jnp.concatenate([params["w_mu"], params["w_lv"]], axis=1)
    b_head = jnp.concatenate([params["b_mu"], params["b_lv"]], axis=1)
    w_head = jnp.pad(w_head, ((0, 0), (0, head_pad - 2 * out_size))).astype(jnp.bfloat16)
    b_head = jnp.pad(b_head, ((0, 0), (0, head_pad - 2 * out_size))).astype(jnp.float32)

    return {
        "w1": w1_p, "g1": params["g1"], "be1": params["be1"],
        "w2": w2_p, "g2": params["g2"], "be2": params["be2"],
        "w3": w3_p, "g3": params["g3"], "be3": params["be3"],
        "w_head": w_head, "b_head": b_head,
    }


def simple_encoder_pallas(x, prep, *, out_size=32):
    """x: (B, ...) flattened to (B, input_size). prep: output of prepare_params.
    Returns (mu, logvar)."""
    B = x.shape[0]
    x2d = x.reshape(B, -1).astype(jnp.float32)
    K = x2d.shape[1]
    K_pad = prep["w1"].shape[0]
    lin1 = prep["w1"].shape[1]
    lin2 = prep["w2"].shape[1]
    lin3 = prep["w3"].shape[1]
    head_pad = prep["w_head"].shape[1]

    # Only per-call input prep: flatten, zero-pad K to a lane multiple, cast bf16 (~14 KiB).
    x_p = jnp.pad(x2d, ((0, 0), (0, K_pad - K))).astype(jnp.bfloat16)

    args = (x_p,
            prep["w1"], prep["g1"], prep["be1"],
            prep["g2"], prep["be2"],
            prep["g3"], prep["be3"],
            prep["b_head"],
            prep["w2"], prep["w3"], prep["w_head"])

    flops = 2 * B * (K_pad * lin1 + lin1 * lin2 + lin2 * lin3 + lin3 * head_pad)
    bytes_accessed = sum(int(a.size) * a.dtype.itemsize for a in args) + B * head_pad * 4

    vmem = pl.BlockSpec(memory_space=pltpu.MemorySpace.VMEM)
    hbm = pl.BlockSpec(memory_space=pl.ANY)

    out = pl.pallas_call(
        encoder_kernel,
        out_shape=jax.ShapeDtypeStruct((B, head_pad), jnp.float32),
        in_specs=[vmem] * 9 + [hbm] * 3,
        out_specs=vmem,
        scratch_shapes=[
            pltpu.VMEM((lin1, lin2), jnp.bfloat16),
            pltpu.VMEM((lin2, lin3), jnp.bfloat16),
            pltpu.VMEM((lin3, head_pad), jnp.bfloat16),
            pltpu.SemaphoreType.DMA((3,)),
        ],
        cost_estimate=pl.CostEstimate(flops=flops, transcendentals=0,
                                      bytes_accessed=bytes_accessed),
    )(*args)

    mu = out[:, :out_size]
    logvar = out[:, out_size:2 * out_size]
    return mu, logvar


def init_params(key, input_size=784, lin1=256, lin2=256, lin3=256, out=32):
    """Deterministic PyTorch-style init. Linear weights stored as (in, out)."""
    ks = jax.random.split(key, 10)

    def linear(kw, kb, fan_in, fan_out):
        bound = 1.0 / jnp.sqrt(fan_in)
        w = jax.random.uniform(kw, (fan_in, fan_out), jnp.float32, -bound, bound)
        b = jax.random.uniform(kb, (1, fan_out), jnp.float32, -bound, bound)
        return w, b

    w1, b1 = linear(ks[0], ks[1], input_size, lin1)
    w2, b2 = linear(ks[2], ks[3], lin1, lin2)
    w3, b3 = linear(ks[4], ks[5], lin2, lin3)
    w_mu, b_mu = linear(ks[6], ks[7], lin3, out)
    w_lv, b_lv = linear(ks[8], ks[9], lin3, out)

    return {
        "w1": w1, "b1": b1, "g1": jnp.ones((1, lin1), jnp.float32), "be1": jnp.zeros((1, lin1), jnp.float32),
        "w2": w2, "b2": b2, "g2": jnp.ones((1, lin2), jnp.float32), "be2": jnp.zeros((1, lin2), jnp.float32),
        "w3": w3, "b3": b3, "g3": jnp.ones((1, lin3), jnp.float32), "be3": jnp.zeros((1, lin3), jnp.float32),
        "w_mu": w_mu, "b_mu": b_mu,
        "w_lv": w_lv, "b_lv": b_lv,
    }


def reference_forward(x, p):
    """Pure-JAX f32 reference, faithful to the PyTorch module (incl. hidden biases)."""
    B = x.shape[0]
    h = x.reshape(B, -1).astype(jnp.float32)

    def layer(h, w, b, g, be):
        h = h @ w + b
        mean = jnp.mean(h, axis=0, keepdims=True)
        var = jnp.mean((h - mean) ** 2, axis=0, keepdims=True)
        h = (h - mean) * jax.lax.rsqrt(var + BN_EPS) * g + be
        return jnp.maximum(h, 0.0)

    h = layer(h, p["w1"], p["b1"], p["g1"], p["be1"])
    h = layer(h, p["w2"], p["b2"], p["g2"], p["be2"])
    h = layer(h, p["w3"], p["b3"], p["g3"], p["be3"])
    return h @ p["w_mu"] + p["b_mu"], h @ p["w_lv"] + p["b_lv"]


if __name__ == "__main__":
    key = jax.random.PRNGKey(0)
    k_x, k_p = jax.random.split(key)

    # Small batch, input consistent with input_size=784 (MNIST-like 1x28x28).
    B = 8
    x = jax.random.normal(k_x, (B, 1, 28, 28), jnp.float32)
    params = init_params(k_p)

    # One-time weight prep (padding / bf16 cast / head fusion) done outside the forward.
    prep = prepare_params(params)

    fwd = jax.jit(simple_encoder_pallas, static_argnames=("out_size",))
    mu, logvar = fwd(x, prep, out_size=32)
    jax.block_until_ready((mu, logvar))

    mu_ref, logvar_ref = reference_forward(x, params)
    assert mu.shape == (B, 32) and logvar.shape == (B, 32)
    # bf16 MXU inputs (f32 accumulate) -> slightly looser tolerance than pure f32.
    assert jnp.allclose(mu, mu_ref, atol=5e-2, rtol=5e-2)
    assert jnp.allclose(logvar, logvar_ref, atol=5e-2, rtol=5e-2)

    print("KERNEL_OK")
</pallas_src>

<mosaic_0001>
module attributes {stable_mosaic.version = 11 : i64} {
  func.func @encoder_kernel(%arg0: memref<8x896xbf16, #tpu.memory_space<vmem>>, %arg1: memref<896x256xbf16, #tpu.memory_space<vmem>>, %arg2: memref<1x256xf32, #tpu.memory_space<vmem>>, %arg3: memref<1x256xf32, #tpu.memory_space<vmem>>, %arg4: memref<1x256xf32, #tpu.memory_space<vmem>>, %arg5: memref<1x256xf32, #tpu.memory_space<vmem>>, %arg6: memref<1x256xf32, #tpu.memory_space<vmem>>, %arg7: memref<1x256xf32, #tpu.memory_space<vmem>>, %arg8: memref<1x128xf32, #tpu.memory_space<vmem>>, %arg9: memref<256x256xbf16, #tpu.memory_space<any>>, %arg10: memref<256x256xbf16, #tpu.memory_space<any>>, %arg11: memref<256x128xbf16, #tpu.memory_space<any>>, %arg12: memref<8x128xf32, #tpu.memory_space<vmem>>, %arg13: memref<256x256xbf16, #tpu.memory_space<vmem>>, %arg14: memref<256x256xbf16, #tpu.memory_space<vmem>>, %arg15: memref<256x128xbf16, #tpu.memory_space<vmem>>, %arg16: memref<3x!tpu.dma_semaphore, #tpu.memory_space<semaphore_mem>>) attributes {dimension_semantics = [], scalar_prefetch = 0 : i64, scratch_operands = 4 : i64, tpu.core_type = #tpu.core_type<tc>} {
    %c0_i32 = arith.constant 0 : i32
    %0 = tpu.memref_slice %arg16[%c0_i32] : memref<3x!tpu.dma_semaphore, #tpu.memory_space<semaphore_mem>> -> memref<1x!tpu.dma_semaphore, #tpu.memory_space<semaphore_mem>>
    %1 = tpu.memref_squeeze %0 : memref<1x!tpu.dma_semaphore, #tpu.memory_space<semaphore_mem>> -> memref<!tpu.dma_semaphore, #tpu.memory_space<semaphore_mem>>
    tpu.enqueue_dma source(%arg9 : memref<256x256xbf16, #tpu.memory_space<any>>) target(%arg13 : memref<256x256xbf16, #tpu.memory_space<vmem>>) target_semaphore(%1 : memref<!tpu.dma_semaphore, #tpu.memory_space<semaphore_mem>>)
    %c1_i32 = arith.constant 1 : i32
    %2 = tpu.memref_slice %arg16[%c1_i32] : memref<3x!tpu.dma_semaphore, #tpu.memory_space<semaphore_mem>> -> memref<1x!tpu.dma_semaphore, #tpu.memory_space<semaphore_mem>>
    %3 = tpu.memref_squeeze %2 : memref<1x!tpu.dma_semaphore, #tpu.memory_space<semaphore_mem>> -> memref<!tpu.dma_semaphore, #tpu.memory_space<semaphore_mem>>
    tpu.enqueue_dma source(%arg10 : memref<256x256xbf16, #tpu.memory_space<any>>) target(%arg14 : memref<256x256xbf16, #tpu.memory_space<vmem>>) target_semaphore(%3 : memref<!tpu.dma_semaphore, #tpu.memory_space<semaphore_mem>>)
    %c2_i32 = arith.constant 2 : i32
    %4 = tpu.memref_slice %arg16[%c2_i32] : memref<3x!tpu.dma_semaphore, #tpu.memory_space<semaphore_mem>> -> memref<1x!tpu.dma_semaphore, #tpu.memory_space<semaphore_mem>>
    %5 = tpu.memref_squeeze %4 : memref<1x!tpu.dma_semaphore, #tpu.memory_space<semaphore_mem>> -> memref<!tpu.dma_semaphore, #tpu.memory_space<semaphore_mem>>
    tpu.enqueue_dma source(%arg11 : memref<256x128xbf16, #tpu.memory_space<any>>) target(%arg15 : memref<256x128xbf16, #tpu.memory_space<vmem>>) target_semaphore(%5 : memref<!tpu.dma_semaphore, #tpu.memory_space<semaphore_mem>>)
    %c0 = arith.constant 0 : index
    %c0_0 = arith.constant 0 : index
    %6 = vector.load %arg0[%c0, %c0_0] : memref<8x896xbf16, #tpu.memory_space<vmem>>, vector<8x896xbf16>
    %c0_1 = arith.constant 0 : index
    %c0_2 = arith.constant 0 : index
    %7 = vector.load %arg1[%c0_1, %c0_2] : memref<896x256xbf16, #tpu.memory_space<vmem>>, vector<896x256xbf16>
    %cst = arith.constant dense<0.000000e+00> : vector<8x256xf32>
    %8 = tpu.matmul %6, %7, %cst {dimension_numbers = #tpu.dot_dimension_numbers<[1], [0], [0], [1], [0, 0, 1, 1], [], []>} : vector<8x896xbf16>, vector<896x256xbf16>, vector<8x256xf32> -> vector<8x256xf32>
    %cst_3 = arith.constant dense<0.000000e+00> : vector<256xf32>
    %9 = vector.multi_reduction <add>, %8, %cst_3 [0] : vector<8x256xf32> to vector<256xf32>
    %10 = vector.shape_cast %9 : vector<256xf32> to vector<1x256xf32>
    %cst_4 = arith.constant 8.000000e+00 : f32
    %11 = vector.broadcast %cst_4 : f32 to vector<1x256xf32>
    %12 = arith.divf %10, %11 : vector<1x256xf32>
    %13 = vector.broadcast %12 : vector<1x256xf32> to vector<8x256xf32>
    %14 = arith.subf %8, %13 : vector<8x256xf32>
    %15 = arith.mulf %14, %14 : vector<8x256xf32>
    %cst_5 = arith.constant dense<0.000000e+00> : vector<256xf32>
    %16 = vector.multi_reduction <add>, %15, %cst_5 [0] : vector<8x256xf32> to vector<256xf32>
    %17 = vector.shape_cast %16 : vector<256xf32> to vector<1x256xf32>
    %cst_6 = arith.constant 8.000000e+00 : f32
    %18 = vector.broadcast %cst_6 : f32 to vector<1x256xf32>
    %19 = arith.divf %17, %18 : vector<1x256xf32>
    %c0_7 = arith.constant 0 : index
    %c0_8 = arith.constant 0 : index
    %20 = vector.load %arg2[%c0_7, %c0_8] : memref<1x256xf32, #tpu.memory_space<vmem>>, vector<1x256xf32>
    %cst_9 = arith.constant 9.99999974E-6 : f32
    %21 = vector.broadcast %cst_9 : f32 to vector<1x256xf32>
    %22 = arith.addf %19, %21 : vector<1x256xf32>
    %23 = math.rsqrt %22 : vector<1x256xf32>
    %24 = arith.mulf %20, %23 : vector<1x256xf32>
    %c0_10 = arith.constant 0 : index
    %c0_11 = arith.constant 0 : index
    %25 = vector.load %arg3[%c0_10, %c0_11] : memref<1x256xf32, #tpu.memory_space<vmem>>, vector<1x256xf32>
    %26 = arith.mulf %12, %24 : vector<1x256xf32>
    %27 = arith.subf %25, %26 : vector<1x256xf32>
    %28 = vector.broadcast %24 : vector<1x256xf32> to vector<8x256xf32>
    %29 = arith.mulf %8, %28 : vector<8x256xf32>
    %30 = vector.broadcast %27 : vector<1x256xf32> to vector<8x256xf32>
    %31 = arith.addf %29, %30 : vector<8x256xf32>
    %cst_12 = arith.constant 0.000000e+00 : f32
    %32 = vector.broadcast %cst_12 : f32 to vector<8x256xf32>
    %33 = arith.maximumf %31, %32 : vector<8x256xf32>
    %34 = arith.truncf %33 : vector<8x256xf32> to vector<8x256xbf16>
    %c0_i32_13 = arith.constant 0 : i32
    %35 = tpu.memref_slice %arg16[%c0_i32_13] : memref<3x!tpu.dma_semaphore, #tpu.memory_space<semaphore_mem>> -> memref<1x!tpu.dma_semaphore, #tpu.memory_space<semaphore_mem>>
    %36 = tpu.memref_squeeze %35 : memref<1x!tpu.dma_semaphore, #tpu.memory_space<semaphore_mem>> -> memref<!tpu.dma_semaphore, #tpu.memory_space<semaphore_mem>>
    tpu.wait_dma2 semaphore(%36 : memref<!tpu.dma_semaphore, #tpu.memory_space<semaphore_mem>>) src(%arg9 : memref<256x256xbf16, #tpu.memory_space<any>>) dst(%arg13 : memref<256x256xbf16, #tpu.memory_space<vmem>>)
    %c0_14 = arith.constant 0 : index
    %c0_15 = arith.constant 0 : index
    %37 = vector.load %arg13[%c0_14, %c0_15] : memref<256x256xbf16, #tpu.memory_space<vmem>>, vector<256x256xbf16>
    %cst_16 = arith.constant dense<0.000000e+00> : vector<8x256xf32>
    %38 = tpu.matmul %34, %37, %cst_16 {dimension_numbers = #tpu.dot_dimension_numbers<[1], [0], [0], [1], [0, 0, 1, 1], [], []>} : vector<8x256xbf16>, vector<256x256xbf16>, vector<8x256xf32> -> vector<8x256xf32>
    %cst_17 = arith.constant dense<0.000000e+00> : vector<256xf32>
    %39 = vector.multi_reduction <add>, %38, %cst_17 [0] : vector<8x256xf32> to vector<256xf32>
    %40 = vector.shape_cast %39 : vector<256xf32> to vector<1x256xf32>
    %cst_18 = arith.constant 8.000000e+00 : f32
    %41 = vector.broadcast %cst_18 : f32 to vector<1x256xf32>
    %42 = arith.divf %40, %41 : vector<1x256xf32>
    %43 = vector.broadcast %42 : vector<1x256xf32> to vector<8x256xf32>
    %44 = arith.subf %38, %43 : vector<8x256xf32>
    %45 = arith.mulf %44, %44 : vector<8x256xf32>
    %cst_19 = arith.constant dense<0.000000e+00> : vector<256xf32>
    %46 = vector.multi_reduction <add>, %45, %cst_19 [0] : vector<8x256xf32> to vector<256xf32>
    %47 = vector.shape_cast %46 : vector<256xf32> to vector<1x256xf32>
    %cst_20 = arith.constant 8.000000e+00 : f32
    %48 = vector.broadcast %cst_20 : f32 to vector<1x256xf32>
    %49 = arith.divf %47, %48 : vector<1x256xf32>
    %c0_21 = arith.constant 0 : index
    %c0_22 = arith.constant 0 : index
    %50 = vector.load %arg4[%c0_21, %c0_22] : memref<1x256xf32, #tpu.memory_space<vmem>>, vector<1x256xf32>
    %cst_23 = arith.constant 9.99999974E-6 : f32
    %51 = vector.broadcast %cst_23 : f32 to vector<1x256xf32>
    %52 = arith.addf %49, %51 : vector<1x256xf32>
    %53 = math.rsqrt %52 : vector<1x256xf32>
    %54 = arith.mulf %50, %53 : vector<1x256xf32>
    %c0_24 = arith.constant 0 : index
    %c0_25 = arith.constant 0 : index
    %55 = vector.load %arg5[%c0_24, %c0_25] : memref<1x256xf32, #tpu.memory_space<vmem>>, vector<1x256xf32>
    %56 = arith.mulf %42, %54 : vector<1x256xf32>
    %57 = arith.subf %55, %56 : vector<1x256xf32>
    %58 = vector.broadcast %54 : vector<1x256xf32> to vector<8x256xf32>
    %59 = arith.mulf %38, %58 : vector<8x256xf32>
    %60 = vector.broadcast %57 : vector<1x256xf32> to vector<8x256xf32>
    %61 = arith.addf %59, %60 : vector<8x256xf32>
    %cst_26 = arith.constant 0.000000e+00 : f32
    %62 = vector.broadcast %cst_26 : f32 to vector<8x256xf32>
    %63 = arith.maximumf %61, %62 : vector<8x256xf32>
    %64 = arith.truncf %63 : vector<8x256xf32> to vector<8x256xbf16>
    %c1_i32_27 = arith.constant 1 : i32
    %65 = tpu.memref_slice %arg16[%c1_i32_27] : memref<3x!tpu.dma_semaphore, #tpu.memory_space<semaphore_mem>> -> memref<1x!tpu.dma_semaphore, #tpu.memory_space<semaphore_mem>>
    %66 = tpu.memref_squeeze %65 : memref<1x!tpu.dma_semaphore, #tpu.memory_space<semaphore_mem>> -> memref<!tpu.dma_semaphore, #tpu.memory_space<semaphore_mem>>
    tpu.wait_dma2 semaphore(%66 : memref<!tpu.dma_semaphore, #tpu.memory_space<semaphore_mem>>) src(%arg10 : memref<256x256xbf16, #tpu.memory_space<any>>) dst(%arg14 : memref<256x256xbf16, #tpu.memory_space<vmem>>)
    %c0_28 = arith.constant 0 : index
    %c0_29 = arith.constant 0 : index
    %67 = vector.load %arg14[%c0_28, %c0_29] : memref<256x256xbf16, #tpu.memory_space<vmem>>, vector<256x256xbf16>
    %cst_30 = arith.constant dense<0.000000e+00> : vector<8x256xf32>
    %68 = tpu.matmul %64, %67, %cst_30 {dimension_numbers = #tpu.dot_dimension_numbers<[1], [0], [0], [1], [0, 0, 1, 1], [], []>} : vector<8x256xbf16>, vector<256x256xbf16>, vector<8x256xf32> -> vector<8x256xf32>
    %cst_31 = arith.constant dense<0.000000e+00> : vector<256xf32>
    %69 = vector.multi_reduction <add>, %68, %cst_31 [0] : vector<8x256xf32> to vector<256xf32>
    %70 = vector.shape_cast %69 : vector<256xf32> to vector<1x256xf32>
    %cst_32 = arith.constant 8.000000e+00 : f32
    %71 = vector.broadcast %cst_32 : f32 to vector<1x256xf32>
    %72 = arith.divf %70, %71 : vector<1x256xf32>
    %73 = vector.broadcast %72 : vector<1x256xf32> to vector<8x256xf32>
    %74 = arith.subf %68, %73 : vector<8x256xf32>
    %75 = arith.mulf %74, %74 : vector<8x256xf32>
    %cst_33 = arith.constant dense<0.000000e+00> : vector<256xf32>
    %76 = vector.multi_reduction <add>, %75, %cst_33 [0] : vector<8x256xf32> to vector<256xf32>
    %77 = vector.shape_cast %76 : vector<256xf32> to vector<1x256xf32>
    %cst_34 = arith.constant 8.000000e+00 : f32
    %78 = vector.broadcast %cst_34 : f32 to vector<1x256xf32>
    %79 = arith.divf %77, %78 : vector<1x256xf32>
    %c0_35 = arith.constant 0 : index
    %c0_36 = arith.constant 0 : index
    %80 = vector.load %arg6[%c0_35, %c0_36] : memref<1x256xf32, #tpu.memory_space<vmem>>, vector<1x256xf32>
    %cst_37 = arith.constant 9.99999974E-6 : f32
    %81 = vector.broadcast %cst_37 : f32 to vector<1x256xf32>
    %82 = arith.addf %79, %81 : vector<1x256xf32>
    %83 = math.rsqrt %82 : vector<1x256xf32>
    %84 = arith.mulf %80, %83 : vector<1x256xf32>
    %c0_38 = arith.constant 0 : index
    %c0_39 = arith.constant 0 : index
    %85 = vector.load %arg7[%c0_38, %c0_39] : memref<1x256xf32, #tpu.memory_space<vmem>>, vector<1x256xf32>
    %86 = arith.mulf %72, %84 : vector<1x256xf32>
    %87 = arith.subf %85, %86 : vector<1x256xf32>
    %88 = vector.broadcast %84 : vector<1x256xf32> to vector<8x256xf32>
    %89 = arith.mulf %68, %88 : vector<8x256xf32>
    %90 = vector.broadcast %87 : vector<1x256xf32> to vector<8x256xf32>
    %91 = arith.addf %89, %90 : vector<8x256xf32>
    %cst_40 = arith.constant 0.000000e+00 : f32
    %92 = vector.broadcast %cst_40 : f32 to vector<8x256xf32>
    %93 = arith.maximumf %91, %92 : vector<8x256xf32>
    %94 = arith.truncf %93 : vector<8x256xf32> to vector<8x256xbf16>
    %c2_i32_41 = arith.constant 2 : i32
    %95 = tpu.memref_slice %arg16[%c2_i32_41] : memref<3x!tpu.dma_semaphore, #tpu.memory_space<semaphore_mem>> -> memref<1x!tpu.dma_semaphore, #tpu.memory_space<semaphore_mem>>
    %96 = tpu.memref_squeeze %95 : memref<1x!tpu.dma_semaphore, #tpu.memory_space<semaphore_mem>> -> memref<!tpu.dma_semaphore, #tpu.memory_space<semaphore_mem>>
    tpu.wait_dma2 semaphore(%96 : memref<!tpu.dma_semaphore, #tpu.memory_space<semaphore_mem>>) src(%arg11 : memref<256x128xbf16, #tpu.memory_space<any>>) dst(%arg15 : memref<256x128xbf16, #tpu.memory_space<vmem>>)
    %c0_42 = arith.constant 0 : index
    %c0_43 = arith.constant 0 : index
    %97 = vector.load %arg15[%c0_42, %c0_43] : memref<256x128xbf16, #tpu.memory_space<vmem>>, vector<256x128xbf16>
    %cst_44 = arith.constant dense<0.000000e+00> : vector<8x128xf32>
    %98 = tpu.matmul %94, %97, %cst_44 {dimension_numbers = #tpu.dot_dimension_numbers<[1], [0], [0], [1], [0, 0, 1, 1], [], []>} : vector<8x256xbf16>, vector<256x128xbf16>, vector<8x128xf32> -> vector<8x128xf32>
    %c0_45 = arith.constant 0 : index
    %c0_46 = arith.constant 0 : index
    %99 = vector.load %arg8[%c0_45, %c0_46] : memref<1x128xf32, #tpu.memory_space<vmem>>, vector<1x128xf32>
    %100 = vector.broadcast %99 : vector<1x128xf32> to vector<8x128xf32>
    %101 = arith.addf %98, %100 : vector<8x128xf32>
    %c0_47 = arith.constant 0 : index
    %c0_48 = arith.constant 0 : index
    %102 = vector.load %arg12[%c0_47, %c0_48] : memref<8x128xf32, #tpu.memory_space<vmem>>, vector<8x128xf32>
    tpu.vector_store %arg12[%c0_47, %c0_48], %101 {strides = array<i32>} : memref<8x128xf32, #tpu.memory_space<vmem>>, vector<8x128xf32>,
    return
  }
}

</mosaic_0001>

<llo_original>
// kernel: simple_encoder_pallas.1
$region0: #{simple_encoder_pallas.1}
  #allocation0 [shape = 'u32[]', space=smem, size = 0x4, offset = 0x4, fixed_abs, tag = 'smem constant byte address 0x4 - core index']
  #allocation1 [shape = 'u32[144,128]{1,0:T(1,128)}', space=vmem, size = 0x12000, scoped, tag = 'internal scratch']
  #allocation2 [shape = 'bf16[256,256]{1,0:T(16,128)(2,1)}', space=vmem, size = 0x20000, scoped, tag = 'scratch operand']
  #allocation3 [shape = 'bf16[256,256]{1,0:T(16,128)(2,1)}', space=vmem, size = 0x20000, scoped, tag = 'scratch operand']
  #allocation4 [shape = 'bf16[256,128]{1,0:T(16,128)(2,1)}', space=vmem, size = 0x10000, scoped, tag = 'scratch operand']
  #allocation5 [shape = 's32[3]{0}', space=sflag, size = 0xc, scoped, tag = 'scratch operand']
  #allocation8 [shape = 's32[]', space=sflag, size = 0x4, offset = 0, fixed_abs, tag = 'sflag constant byte address 0x0 - dummy sync flag']
  #allocation9 [shape = 's32[]', space=sflag, size = 0x4, offset = 0, fixed_abs, tag = 'sflag constant byte address 0x0 - dummy sync flag']
  #allocation10 [shape = 's32[]', space=sflag, size = 0x4, offset = 0, fixed_abs, tag = 'sflag constant byte address 0x0 - dummy sync flag']
  #allocation11 [shape = 's32[]', space=sflag, size = 0x4, offset = 0, fixed_abs, tag = 'sflag constant byte address 0x0 - dummy sync flag']
  #allocation12 [shape = 'u32[]', space=smem, size = 0x4, offset = 0x44, fixed_abs, tag = 'smem constant byte address 0x44 - assertion arg 0']
  #allocation13 [shape = 'u32[]', space=smem, size = 0x4, offset = 0x48, fixed_abs, tag = 'smem constant byte address 0x48 - assertion arg 1']
  %s0 = inlined_call_operand.vmem [shape: bf16[8,896], index: 0, kind: input, shape index: {}]
  %s1 = inlined_call_operand.hbm [shape: bf16[896,256], index: 1, kind: input, shape index: {}]
  %s2 = inlined_call_operand.vmem [shape: f32[1,256], index: 2, kind: input, shape index: {}]
  %s3 = inlined_call_operand.vmem [shape: f32[1,256], index: 3, kind: input, shape index: {}]
  %s4 = inlined_call_operand.vmem [shape: f32[1,256], index: 4, kind: input, shape index: {}]
  %s5 = inlined_call_operand.vmem [shape: f32[1,256], index: 5, kind: input, shape index: {}]
  %s6 = inlined_call_operand.vmem [shape: f32[1,256], index: 6, kind: input, shape index: {}]
  %s7 = inlined_call_operand.vmem [shape: f32[1,256], index: 7, kind: input, shape index: {}]
  %s8 = inlined_call_operand.vmem [shape: f32[1,128], index: 8, kind: input, shape index: {}]
  %s9 = inlined_call_operand.vmem [shape: bf16[256,256], index: 9, kind: input, shape index: {}]
  %s10 = inlined_call_operand.vmem [shape: bf16[256,256], index: 10, kind: input, shape index: {}]
  %s11 = inlined_call_operand.hbm [shape: bf16[256,128], index: 11, kind: input, shape index: {}]
  %s12 = inlined_call_operand.vmem [shape: f32[8,128], index: 12, kind: output, shape index: {}]
  %s13 = sld [smem:[#allocation0]]
  $region128: #{simple_encoder_pallas.1} parent=0
    _
  %s15 = ssub.s32 1, %s13
  %s16 = scalar_select 0, %s15, %s13
  $region1: #{simple_encoder_pallas.1} parent=0
    #allocation6 [shape = 'u8[458752]{0}', space=vmem, size = 0x70000, scoped, tag = 'input window, operand 1, single buffered']
    #allocation7 [shape = 's32[1]{0}', space=sflag, size = 0x4, scoped, tag = 'scoped memory for simple_encoder_pallas.1']
    %17 = vsyncpa [#allocation7], 0
    // Predicated region
    $region2: #{simple_encoder_pallas.1} parent=1 // pred_check
      _
    $region3: #{simple_encoder_pallas.1} parent=1 // pred_check_branch
      %19 = sbr.rel (0) target = $region5
    $region4: #{simple_encoder_pallas.1} parent=1 // pred_region
      _
    $region5: #{simple_encoder_pallas.1} parent=1 // pred_fallthru
      _
    // Predicated region
    $region6: #{simple_encoder_pallas.1} parent=1 // pred_check
      _
    $region7: #{simple_encoder_pallas.1} parent=1 // pred_check_branch
      %21 = sbr.rel (0) target = $region9
    $region8: #{simple_encoder_pallas.1} parent=1 // pred_region
      %s23 = ssub.s32 14336, 14336
      %24 = vsyncadd [#allocation7], %s23
      %s25 = sshll.u32 [#allocation6], 4
      %s26 = int_to_ptr.vmem [resolvable:$true] %s25
      %31 = dma.hbm_to_vmem [thread:$0]  %s1, 14336, %s26, [#allocation7], 128, 128, 8
    $region9: #{simple_encoder_pallas.1} parent=1 // pred_fallthru
      _
    // Predicated region
    $region10: #{simple_encoder_pallas.1} parent=1 // pred_check
      _
    $region11: #{simple_encoder_pallas.1} parent=1 // pred_check_branch
      %33 = sbr.rel (0) target = $region13
    $region12: #{simple_encoder_pallas.1} parent=1 // pred_region
      _
    $region13: #{simple_encoder_pallas.1} parent=1 // pred_fallthru
      _
    // Predicated region
    $region14: #{simple_encoder_pallas.1} parent=1 // pred_check
      _
    $region15: #{simple_encoder_pallas.1} parent=1 // pred_check_branch
      %35 = sbr.rel (0) target = $region17
    $region16: #{simple_encoder_pallas.1} parent=1 // pred_region
      _
    $region17: #{simple_encoder_pallas.1} parent=1 // pred_fallthru
      _
    // Predicated region
    $region18: #{simple_encoder_pallas.1} parent=1 // pred_check
      _
    $region19: #{simple_encoder_pallas.1} parent=1 // pred_check_branch
      %37 = sbr.rel (0) target = $region21
    $region20: #{simple_encoder_pallas.1} parent=1 // pred_region
      _
    $region21: #{simple_encoder_pallas.1} parent=1 // pred_fallthru
      _
    // Predicated region
    $region22: #{simple_encoder_pallas.1} parent=1 // pred_check
      _
    $region23: #{simple_encoder_pallas.1} parent=1 // pred_check_branch
      %39 = sbr.rel (0) target = $region25
    $region24: #{simple_encoder_pallas.1} parent=1 // pred_region
      _
    $region25: #{simple_encoder_pallas.1} parent=1 // pred_fallthru
      _
    // Predicated region
    $region26: #{simple_encoder_pallas.1} parent=1 // pred_check
      _
    $region27: #{simple_encoder_pallas.1} parent=1 // pred_check_branch
      %41 = sbr.rel (0) target = $region29
    $region28: #{simple_encoder_pallas.1} parent=1 // pred_region
      _
    $region29: #{simple_encoder_pallas.1} parent=1 // pred_fallthru
      _
    // Predicated region
    $region30: #{simple_encoder_pallas.1} parent=1 // pred_check
      _
    $region31: #{simple_encoder_pallas.1} parent=1 // pred_check_branch
      %43 = sbr.rel (0) target = $region33
    $region32: #{simple_encoder_pallas.1} parent=1 // pred_region
      _
    $region33: #{simple_encoder_pallas.1} parent=1 // pred_fallthru
      _
    // Predicated region
    $region34: #{simple_encoder_pallas.1} parent=1 // pred_check
      _
    $region35: #{simple_encoder_pallas.1} parent=1 // pred_check_branch
      %45 = sbr.rel (0) target = $region37
    $region36: #{simple_encoder_pallas.1} parent=1 // pred_region
      _
    $region37: #{simple_encoder_pallas.1} parent=1 // pred_fallthru
      _
    // Predicated region
    $region38: #{simple_encoder_pallas.1} parent=1 // pred_check
      _
    $region39: #{simple_encoder_pallas.1} parent=1 // pred_check_branch
      %47 = sbr.rel (0) target = $region41
    $region40: #{simple_encoder_pallas.1} parent=1 // pred_region
      %48 = dma.done [#allocation7], 14336
    $region41: #{simple_encoder_pallas.1} parent=1 // pred_fallthru
      _
    %p51 = scmp.lt.u32.totalorder 4, 8
    %p52 = pneg %p51
    // Predicated region
    $region42: #{simple_encoder_pallas.1} parent=1 // pred_check
      _
    $region43: #{simple_encoder_pallas.1} parent=1 // pred_check_branch
      %54 = sbr.rel (%p51) target = $region45
    $region44: #{simple_encoder_pallas.1} parent=1 // pred_region
      %s195 = sand.u32 4, 7
      %p196 = scmp.eq.s32.totalorder %s195, 0
      %p197 = pneg %p196
      // Predicated region
      $region57: #{simple_encoder_pallas.1} parent=44 // pred_check
        _
      $region58: #{simple_encoder_pallas.1} parent=44 // pred_check_branch
        %199 = sbr.rel (%p196) target = $region60
      $region59: #{simple_encoder_pallas.1} parent=44 // pred_region
        %s200 = sand.u32 4, 7
        %s201 = ssub.s32 4, %s200
        %s202 = scalar_lea.vmem %s9, %s201
        %s203 = ssub.s32 4, %s200
        %s204 = scalar_lea.vmem [#allocation2], %s203
        loop: start=0, step=1, limit=1
        $region61: #{simple_encoder_pallas.1} parent=59 // loop_pre_header
          _
        $region62: #{simple_encoder_pallas.1} parent=59 // loop_header
          %s206 = sphi 0, %s210
          %p207 = scmp.ge.s32.totalorder %s206, 1
          %s211 = sphi %s9, %s9
          %s212 = sphi [#allocation2], [#allocation2]
        $region63: #{simple_encoder_pallas.1} parent=59 // loop_header_branch
          %209 = sbr.rel (%p207) target = $region67
        $region64: #{simple_encoder_pallas.1} parent=59 // loop_body
          _
        $region65: #{simple_encoder_pallas.1} parent=59 // loop_footer
          %s210 = sadd.s32 1, %s206
        $region66: #{simple_encoder_pallas.1} parent=59 // loop_footer_branch
          %205 = sbr.rel target = $region62
        $region67: #{simple_encoder_pallas.1} parent=59 // loop_exit
          _
        %s213 = sshllo.u32 0, %s200
        loop: start=0, step=1, limit=1
        $region68: #{simple_encoder_pallas.1} parent=59 // loop_pre_header
          _
        $region69: #{simple_encoder_pallas.1} parent=59 // loop_header
          %s215 = sphi 0, %s219
          %p216 = scmp.ge.s32.totalorder %s215, 1
          %s220 = sphi %s202, %s202
          %s221 = sphi %s204, %s204
        $region70: #{simple_encoder_pallas.1} parent=59 // loop_header_branch
          %218 = sbr.rel (%p216) target = $region74
        $region71: #{simple_encoder_pallas.1} parent=59 // loop_body
          %v222 = vld [vmem:[%s220] sm:%s213]
          %223 = vst [vmem:[%s221] sm:%s213] %v222
          %v224 = vld [vmem:[%s220 + $0x8] sm:%s213]
          %225 = vst [vmem:[%s221 + $0x4] sm:%s213] %v224
          %v226 = vld [vmem:[%s220 + $0x4] sm:%s213]
          %227 = vst [vmem:[%s221 + $0x8] sm:%s213] %v226
          %v228 = vld [vmem:[%s220 + $0xc] sm:%s213]
          %229 = vst [vmem:[%s221 + $0xc] sm:%s213] %v228
          %v230 = vld [vmem:[%s220 + $0x10] sm:%s213]
          %231 = vst [vmem:[%s221 + $0x10] sm:%s213] %v230
          %v232 = vld [vmem:[%s220 + $0x18] sm:%s213]
          %233 = vst [vmem:[%s221 + $0x14] sm:%s213] %v232
          %v234 = vld [vmem:[%s220 + $0x14] sm:%s213]
          %235 = vst [vmem:[%s221 + $0x18] sm:%s213] %v234
          %v236 = vld [vmem:[%s220 + $0x1c] sm:%s213]
          %237 = vst [vmem:[%s221 + $0x1c] sm:%s213] %v236
          %v238 = vld [vmem:[%s220 + $0x20] sm:%s213]
          %239 = vst [vmem:[%s221 + $0x20] sm:%s213] %v238
          %v240 = vld [vmem:[%s220 + $0x28] sm:%s213]
          %241 = vst [vmem:[%s221 + $0x24] sm:%s213] %v240
          %v242 = vld [vmem:[%s220 + $0x24] sm:%s213]
          %243 = vst [vmem:[%s221 + $0x28] sm:%s213] %v242
          %v244 = vld [vmem:[%s220 + $0x2c] sm:%s213]
          %245 = vst [vmem:[%s221 + $0x2c] sm:%s213] %v244
          %v246 = vld [vmem:[%s220 + $0x30] sm:%s213]
          %247 = vst [vmem:[%s221 + $0x30] sm:%s213] %v246
          %v248 = vld [vmem:[%s220 + $0x38] sm:%s213]
          %249 = vst [vmem:[%s221 + $0x34] sm:%s213] %v248
          %v250 = vld [vmem:[%s220 + $0x34] sm:%s213]
          %251 = vst [vmem:[%s221 + $0x38] sm:%s213] %v250
          %v252 = vld [vmem:[%s220 + $0x3c] sm:%s213]
          %253 = vst [vmem:[%s221 + $0x3c] sm:%s213] %v252
          %v254 = vld [vmem:[%s220 + $0x40] sm:%s213]
          %255 = vst [vmem:[%s221 + $0x40] sm:%s213] %v254
          %v256 = vld [vmem:[%s220 + $0x48] sm:%s213]
          %257 = vst [vmem:[%s221 + $0x44] sm:%s213] %v256
          %v258 = vld [vmem:[%s220 + $0x44] sm:%s213]
          %259 = vst [vmem:[%s221 + $0x48] sm:%s213] %v258
          %v260 = vld [vmem:[%s220 + $0x4c] sm:%s213]
          %261 = vst [vmem:[%s221 + $0x4c] sm:%s213] %v260
          %v262 = vld [vmem:[%s220 + $0x50] sm:%s213]
          %263 = vst [vmem:[%s221 + $0x50] sm:%s213] %v262
          %v264 = vld [vmem:[%s220 + $0x58] sm:%s213]
          %265 = vst [vmem:[%s221 + $0x54] sm:%s213] %v264
          %v266 = vld [vmem:[%s220 + $0x54] sm:%s213]
          %267 = vst [vmem:[%s221 + $0x58] sm:%s213] %v266
          %v268 = vld [vmem:[%s220 + $0x5c] sm:%s213]
          %269 = vst [vmem:[%s221 + $0x5c] sm:%s213] %v268
          %v270 = vld [vmem:[%s220 + $0x60] sm:%s213]
          %271 = vst [vmem:[%s221 + $0x60] sm:%s213] %v270
          %v272 = vld [vmem:[%s220 + $0x68] sm:%s213]
          %273 = vst [vmem:[%s221 + $0x64] sm:%s213] %v272
          %v274 = vld [vmem:[%s220 + $0x64] sm:%s213]
          %275 = vst [vmem:[%s221 + $0x68] sm:%s213] %v274
          %v276 = vld [vmem:[%s220 + $0x6c] sm:%s213]
          %277 = vst [vmem:[%s221 + $0x6c] sm:%s213] %v276
          %v278 = vld [vmem:[%s220 + $0x70] sm:%s213]
          %279 = vst [vmem:[%s221 + $0x70] sm:%s213] %v278
          %v280 = vld [vmem:[%s220 + $0x78] sm:%s213]
          %281 = vst [vmem:[%s221 + $0x74] sm:%s213] %v280
          %v282 = vld [vmem:[%s220 + $0x74] sm:%s213]
          %283 = vst [vmem:[%s221 + $0x78] sm:%s213] %v282
          %v284 = vld [vmem:[%s220 + $0x7c] sm:%s213]
          %285 = vst [vmem:[%s221 + $0x7c] sm:%s213] %v284
          %v286 = vld [vmem:[%s220 + $0x80] sm:%s213]
          %287 = vst [vmem:[%s221 + $0x80] sm:%s213] %v286
          %v288 = vld [vmem:[%s220 + $0x88] sm:%s213]
          %289 = vst [vmem:[%s221 + $0x84] sm:%s213] %v288
          %v290 = vld [vmem:[%s220 + $0x84] sm:%s213]
          %291 = vst [vmem:[%s221 + $0x88] sm:%s213] %v290
          %v292 = vld [vmem:[%s220 + $0x8c] sm:%s213]
          %293 = vst [vmem:[%s221 + $0x8c] sm:%s213] %v292
          %v294 = vld [vmem:[%s220 + $0x90] sm:%s213]
          %295 = vst [vmem:[%s221 + $0x90] sm:%s213] %v294
          %v296 = vld [vmem:[%s220 + $0x98] sm:%s213]
          %297 = vst [vmem:[%s221 + $0x94] sm:%s213] %v296
          %v298 = vld [vmem:[%s220 + $0x94] sm:%s213]
          %299 = vst [vmem:[%s221 + $0x98] sm:%s213] %v298
          %v300 = vld [vmem:[%s220 + $0x9c] sm:%s213]
          %301 = vst [vmem:[%s221 + $0x9c] sm:%s213] %v300
          %v302 = vld [vmem:[%s220 + $0xa0] sm:%s213]
          %303 = vst [vmem:[%s221 + $0xa0] sm:%s213] %v302
          %v304 = vld [vmem:[%s220 + $0xa8] sm:%s213]
          %305 = vst [vmem:[%s221 + $0xa4] sm:%s213] %v304
          %v306 = vld [vmem:[%s220 + $0xa4] sm:%s213]
          %307 = vst [vmem:[%s221 + $0xa8] sm:%s213] %v306
          %v308 = vld [vmem:[%s220 + $0xac] sm:%s213]
          %309 = vst [vmem:[%s221 + $0xac] sm:%s213] %v308
          %v310 = vld [vmem:[%s220 + $0xb0] sm:%s213]
          %311 = vst [vmem:[%s221 + $0xb0] sm:%s213] %v310
          %v312 = vld [vmem:[%s220 + $0xb8] sm:%s213]
          %313 = vst [vmem:[%s221 + $0xb4] sm:%s213] %v312
          %v314 = vld [vmem:[%s220 + $0xb4] sm:%s213]
          %315 = vst [vmem:[%s221 + $0xb8] sm:%s213] %v314
          %v316 = vld [vmem:[%s220 + $0xbc] sm:%s213]
          %317 = vst [vmem:[%s221 + $0xbc] sm:%s213] %v316
          %v318 = vld [vmem:[%s220 + $0xc0] sm:%s213]
          %319 = vst [vmem:[%s221 + $0xc0] sm:%s213] %v318
          %v320 = vld [vmem:[%s220 + $0xc8] sm:%s213]
          %321 = vst [vmem:[%s221 + $0xc4] sm:%s213] %v320
          %v322 = vld [vmem:[%s220 + $0xc4] sm:%s213]
          %323 = vst [vmem:[%s221 + $0xc8] sm:%s213] %v322
          %v324 = vld [vmem:[%s220 + $0xcc] sm:%s213]
          %325 = vst [vmem:[%s221 + $0xcc] sm:%s213] %v324
          %v326 = vld [vmem:[%s220 + $0xd0] sm:%s213]
          %327 = vst [vmem:[%s221 + $0xd0] sm:%s213] %v326
          %v328 = vld [vmem:[%s220 + $0xd8] sm:%s213]
          %329 = vst [vmem:[%s221 + $0xd4] sm:%s213] %v328
          %v330 = vld [vmem:[%s220 + $0xd4] sm:%s213]
          %331 = vst [vmem:[%s221 + $0xd8] sm:%s213] %v330
          %v332 = vld [vmem:[%s220 + $0xdc] sm:%s213]
          %333 = vst [vmem:[%s221 + $0xdc] sm:%s213] %v332
          %v334 = vld [vmem:[%s220 + $0xe0] sm:%s213]
          %335 = vst [vmem:[%s221 + $0xe0] sm:%s213] %v334
          %v336 = vld [vmem:[%s220 + $0xe8] sm:%s213]
          %337 = vst [vmem:[%s221 + $0xe4] sm:%s213] %v336
          %v338 = vld [vmem:[%s220 + $0xe4] sm:%s213]
          %339 = vst [vmem:[%s221 + $0xe8] sm:%s213] %v338
          %v340 = vld [vmem:[%s220 + $0xec] sm:%s213]
          %341 = vst [vmem:[%s221 + $0xec] sm:%s213] %v340
          %v342 = vld [vmem:[%s220 + $0xf0] sm:%s213]
          %343 = vst [vmem:[%s221 + $0xf0] sm:%s213] %v342
          %v344 = vld [vmem:[%s220 + $0xf8] sm:%s213]
          %345 = vst [vmem:[%s221 + $0xf4] sm:%s213] %v344
          %v346 = vld [vmem:[%s220 + $0xf4] sm:%s213]
          %347 = vst [vmem:[%s221 + $0xf8] sm:%s213] %v346
          %v348 = vld [vmem:[%s220 + $0xfc] sm:%s213]
          %349 = vst [vmem:[%s221 + $0xfc] sm:%s213] %v348
        $region72: #{simple_encoder_pallas.1} parent=59 // loop_footer
          %s219 = sadd.s32 1, %s215
        $region73: #{simple_encoder_pallas.1} parent=59 // loop_footer_branch
          %214 = sbr.rel target = $region69
        $region74: #{simple_encoder_pallas.1} parent=59 // loop_exit
          _
      $region60: #{simple_encoder_pallas.1} parent=44 // pred_fallthru
        _
    $region45: #{simple_encoder_pallas.1} parent=1 // pred_fallthru
      _
    // Predicated region
    $region46: #{simple_encoder_pallas.1} parent=1 // pred_check
      %p55 = pneg %p51
    $region47: #{simple_encoder_pallas.1} parent=1 // pred_check_branch
      %57 = sbr.rel (%p55) target = $region49
    $region48: #{simple_encoder_pallas.1} parent=1 // pred_region
      %s58 = sshllo.u32 0, 4
      loop: start=0, step=1, limit=1
      $region50: #{simple_encoder_pallas.1} parent=48 // loop_pre_header
        _
      $region51: #{simple_encoder_pallas.1} parent=48 // loop_header
        %s60 = sphi 0, %s64
        %p61 = scmp.ge.s32.totalorder %s60, 1
        %s65 = sphi %s9, %s9
        %s66 = sphi [#allocation2], [#allocation2]
      $region52: #{simple_encoder_pallas.1} parent=48 // loop_header_branch
        %63 = sbr.rel (%p61) target = $region56
      $region53: #{simple_encoder_pallas.1} parent=48 // loop_body
        %v67 = vld [vmem:[%s65] sm:%s58]
        %68 = vst [vmem:[%s66] sm:%s58] %v67
        %v69 = vld [vmem:[%s65 + $0x8] sm:%s58]
        %70 = vst [vmem:[%s66 + $0x4] sm:%s58] %v69
        %v71 = vld [vmem:[%s65 + $0x4] sm:%s58]
        %72 = vst [vmem:[%s66 + $0x8] sm:%s58] %v71
        %v73 = vld [vmem:[%s65 + $0xc] sm:%s58]
        %74 = vst [vmem:[%s66 + $0xc] sm:%s58] %v73
        %v75 = vld [vmem:[%s65 + $0x10] sm:%s58]
        %76 = vst [vmem:[%s66 + $0x10] sm:%s58] %v75
        %v77 = vld [vmem:[%s65 + $0x18] sm:%s58]
        %78 = vst [vmem:[%s66 + $0x14] sm:%s58] %v77
        %v79 = vld [vmem:[%s65 + $0x14] sm:%s58]
        %80 = vst [vmem:[%s66 + $0x18] sm:%s58] %v79
        %v81 = vld [vmem:[%s65 + $0x1c] sm:%s58]
        %82 = vst [vmem:[%s66 + $0x1c] sm:%s58] %v81
        %v83 = vld [vmem:[%s65 + $0x20] sm:%s58]
        %84 = vst [vmem:[%s66 + $0x20] sm:%s58] %v83
        %v85 = vld [vmem:[%s65 + $0x28] sm:%s58]
        %86 = vst [vmem:[%s66 + $0x24] sm:%s58] %v85
        %v87 = vld [vmem:[%s65 + $0x24] sm:%s58]
        %88 = vst [vmem:[%s66 + $0x28] sm:%s58] %v87
        %v89 = vld [vmem:[%s65 + $0x2c] sm:%s58]
        %90 = vst [vmem:[%s66 + $0x2c] sm:%s58] %v89
        %v91 = vld [vmem:[%s65 + $0x30] sm:%s58]
        %92 = vst [vmem:[%s66 + $0x30] sm:%s58] %v91
        %v93 = vld [vmem:[%s65 + $0x38] sm:%s58]
        %94 = vst [vmem:[%s66 + $0x34] sm:%s58] %v93
        %v95 = vld [vmem:[%s65 + $0x34] sm:%s58]
        %96 = vst [vmem:[%s66 + $0x38] sm:%s58] %v95
        %v97 = vld [vmem:[%s65 + $0x3c] sm:%s58]
        %98 = vst [vmem:[%s66 + $0x3c] sm:%s58] %v97
        %v99 = vld [vmem:[%s65 + $0x40] sm:%s58]
        %100 = vst [vmem:[%s66 + $0x40] sm:%s58] %v99
        %v101 = vld [vmem:[%s65 + $0x48] sm:%s58]
        %102 = vst [vmem:[%s66 + $0x44] sm:%s58] %v101
        %v103 = vld [vmem:[%s65 + $0x44] sm:%s58]
        %104 = vst [vmem:[%s66 + $0x48] sm:%s58] %v103
        %v105 = vld [vmem:[%s65 + $0x4c] sm:%s58]
        %106 = vst [vmem:[%s66 + $0x4c] sm:%s58] %v105
        %v107 = vld [vmem:[%s65 + $0x50] sm:%s58]
        %108 = vst [vmem:[%s66 + $0x50] sm:%s58] %v107
        %v109 = vld [vmem:[%s65 + $0x58] sm:%s58]
        %110 = vst [vmem:[%s66 + $0x54] sm:%s58] %v109
        %v111 = vld [vmem:[%s65 + $0x54] sm:%s58]
        %112 = vst [vmem:[%s66 + $0x58] sm:%s58] %v111
        %v113 = vld [vmem:[%s65 + $0x5c] sm:%s58]
        %114 = vst [vmem:[%s66 + $0x5c] sm:%s58] %v113
        %v115 = vld [vmem:[%s65 + $0x60] sm:%s58]
        %116 = vst [vmem:[%s66 + $0x60] sm:%s58] %v115
        %v117 = vld [vmem:[%s65 + $0x68] sm:%s58]
        %118 = vst [vmem:[%s66 + $0x64] sm:%s58] %v117
        %v119 = vld [vmem:[%s65 + $0x64] sm:%s58]
        %120 = vst [vmem:[%s66 + $0x68] sm:%s58] %v119
        %v121 = vld [vmem:[%s65 + $0x6c] sm:%s58]
        %122 = vst [vmem:[%s66 + $0x6c] sm:%s58] %v121
        %v123 = vld [vmem:[%s65 + $0x70] sm:%s58]
        %124 = vst [vmem:[%s66 + $0x70] sm:%s58] %v123
        %v125 = vld [vmem:[%s65 + $0x78] sm:%s58]
        %126 = vst [vmem:[%s66 + $0x74] sm:%s58] %v125
        %v127 = vld [vmem:[%s65 + $0x74] sm:%s58]
        %128 = vst [vmem:[%s66 + $0x78] sm:%s58] %v127
        %v129 = vld [vmem:[%s65 + $0x7c] sm:%s58]
        %130 = vst [vmem:[%s66 + $0x7c] sm:%s58] %v129
        %v131 = vld [vmem:[%s65 + $0x80] sm:%s58]
        %132 = vst [vmem:[%s66 + $0x80] sm:%s58] %v131
        %v133 = vld [vmem:[%s65 + $0x88] sm:%s58]
        %134 = vst [vmem:[%s66 + $0x84] sm:%s58] %v133
        %v135 = vld [vmem:[%s65 + $0x84] sm:%s58]
        %136 = vst [vmem:[%s66 + $0x88] sm:%s58] %v135
        %v137 = vld [vmem:[%s65 + $0x8c] sm:%s58]
        %138 = vst [vmem:[%s66 + $0x8c] sm:%s58] %v137
        %v139 = vld [vmem:[%s65 + $0x90] sm:%s58]
        %140 = vst [vmem:[%s66 + $0x90] sm:%s58] %v139
        %v141 = vld [vmem:[%s65 + $0x98] sm:%s58]
        %142 = vst [vmem:[%s66 + $0x94] sm:%s58] %v141
        %v143 = vld [vmem:[%s65 + $0x94] sm:%s58]
        %144 = vst [vmem:[%s66 + $0x98] sm:%s58] %v143
        %v145 = vld [vmem:[%s65 + $0x9c] sm:%s58]
        %146 = vst [vmem:[%s66 + $0x9c] sm:%s58] %v145
        %v147 = vld [vmem:[%s65 + $0xa0] sm:%s58]
        %148 = vst [vmem:[%s66 + $0xa0] sm:%s58] %v147
        %v149 = vld [vmem:[%s65 + $0xa8] sm:%s58]
        %150 = vst [vmem:[%s66 + $0xa4] sm:%s58] %v149
        %v151 = vld [vmem:[%s65 + $0xa4] sm:%s58]
        %152 = vst [vmem:[%s66 + $0xa8] sm:%s58] %v151
        %v153 = vld [vmem:[%s65 + $0xac] sm:%s58]
        %154 = vst [vmem:[%s66 + $0xac] sm:%s58] %v153
        %v155 = vld [vmem:[%s65 + $0xb0] sm:%s58]
        %156 = vst [vmem:[%s66 + $0xb0] sm:%s58] %v155
        %v157 = vld [vmem:[%s65 + $0xb8] sm:%s58]
        %158 = vst [vmem:[%s66 + $0xb4] sm:%s58] %v157
        %v159 = vld [vmem:[%s65 + $0xb4] sm:%s58]
        %160 = vst [vmem:[%s66 + $0xb8] sm:%s58] %v159
        %v161 = vld [vmem:[%s65 + $0xbc] sm:%s58]
        %162 = vst [vmem:[%s66 + $0xbc] sm:%s58] %v161
        %v163 = vld [vmem:[%s65 + $0xc0] sm:%s58]
        %164 = vst [vmem:[%s66 + $0xc0] sm:%s58] %v163
        %v165 = vld [vmem:[%s65 + $0xc8] sm:%s58]
        %166 = vst [vmem:[%s66 + $0xc4] sm:%s58] %v165
        %v167 = vld [vmem:[%s65 + $0xc4] sm:%s58]
        %168 = vst [vmem:[%s66 + $0xc8] sm:%s58] %v167
        %v169 = vld [vmem:[%s65 + $0xcc] sm:%s58]
        %170 = vst [vmem:[%s66 + $0xcc] sm:%s58] %v169
        %v171 = vld [vmem:[%s65 + $0xd0] sm:%s58]
        %172 = vst [vmem:[%s66 + $0xd0] sm:%s58] %v171
        %v173 = vld [vmem:[%s65 + $0xd8] sm:%s58]
        %174 = vst [vmem:[%s66 + $0xd4] sm:%s58] %v173
        %v175 = vld [vmem:[%s65 + $0xd4] sm:%s58]
        %176 = vst [vmem:[%s66 + $0xd8] sm:%s58] %v175
        %v177 = vld [vmem:[%s65 + $0xdc] sm:%s58]
        %178 = vst [vmem:[%s66 + $0xdc] sm:%s58] %v177
        %v179 = vld [vmem:[%s65 + $0xe0] sm:%s58]
        %180 = vst [vmem:[%s66 + $0xe0] sm:%s58] %v179
        %v181 = vld [vmem:[%s65 + $0xe8] sm:%s58]
        %182 = vst [vmem:[%s66 + $0xe4] sm:%s58] %v181
        %v183 = vld [vmem:[%s65 + $0xe4] sm:%s58]
        %184 = vst [vmem:[%s66 + $0xe8] sm:%s58] %v183
        %v185 = vld [vmem:[%s65 + $0xec] sm:%s58]
        %186 = vst [vmem:[%s66 + $0xec] sm:%s58] %v185
        %v187 = vld [vmem:[%s65 + $0xf0] sm:%s58]
        %188 = vst [vmem:[%s66 + $0xf0] sm:%s58] %v187
        %v189 = vld [vmem:[%s65 + $0xf8] sm:%s58]
        %190 = vst [vmem:[%s66 + $0xf4] sm:%s58] %v189
        %v191 = vld [vmem:[%s65 + $0xf4] sm:%s58]
        %192 = vst [vmem:[%s66 + $0xf8] sm:%s58] %v191
        %v193 = vld [vmem:[%s65 + $0xfc] sm:%s58]
        %194 = vst [vmem:[%s66 + $0xfc] sm:%s58] %v193
      $region54: #{simple_encoder_pallas.1} parent=48 // loop_footer
        %s64 = sadd.s32 1, %s60
      $region55: #{simple_encoder_pallas.1} parent=48 // loop_footer_branch
        %59 = sbr.rel target = $region51
      $region56: #{simple_encoder_pallas.1} parent=48 // loop_exit
        _
    $region49: #{simple_encoder_pallas.1} parent=1 // pred_fallthru
      _
    // Predicated region
    $region75: #{simple_encoder_pallas.1} parent=1 // pred_check
      _
    $region76: #{simple_encoder_pallas.1} parent=1 // pred_check_branch
      %352 = sbr.rel (0) target = $region78
    $region77: #{simple_encoder_pallas.1} parent=1 // pred_region
      %353 = vsyncadd [#allocation5], 4096
    $region78: #{simple_encoder_pallas.1} parent=1 // pred_fallthru
      _
    %s354 = scalar_lea.sflag [#allocation5], 1
    %p356 = scmp.lt.u32.totalorder 4, 8
    %p357 = pneg %p356
    // Predicated region
    $region79: #{simple_encoder_pallas.1} parent=1 // pred_check
      _
    $region80: #{simple_encoder_pallas.1} parent=1 // pred_check_branch
      %359 = sbr.rel (%p356) target = $region82
    $region81: #{simple_encoder_pallas.1} parent=1 // pred_region
      %s500 = sand.u32 4, 7
      %p501 = scmp.eq.s32.totalorder %s500, 0
      %p502 = pneg %p501
      // Predicated region
      $region94: #{simple_encoder_pallas.1} parent=81 // pred_check
        _
      $region95: #{simple_encoder_pallas.1} parent=81 // pred_check_branch
        %504 = sbr.rel (%p501) target = $region97
      $region96: #{simple_encoder_pallas.1} parent=81 // pred_region
        %s505 = sand.u32 4, 7
        %s506 = ssub.s32 4, %s505
        %s507 = scalar_lea.vmem %s10, %s506
        %s508 = ssub.s32 4, %s505
        %s509 = scalar_lea.vmem [#allocation3], %s508
        loop: start=0, step=1, limit=1
        $region98: #{simple_encoder_pallas.1} parent=96 // loop_pre_header
          _
        $region99: #{simple_encoder_pallas.1} parent=96 // loop_header
          %s511 = sphi 0, %s515
          %p512 = scmp.ge.s32.totalorder %s511, 1
          %s516 = sphi %s10, %s10
          %s517 = sphi [#allocation3], [#allocation3]
        $region100: #{simple_encoder_pallas.1} parent=96 // loop_header_branch
          %514 = sbr.rel (%p512) target = $region104
        $region101: #{simple_encoder_pallas.1} parent=96 // loop_body
          _
        $region102: #{simple_encoder_pallas.1} parent=96 // loop_footer
          %s515 = sadd.s32 1, %s511
        $region103: #{simple_encoder_pallas.1} parent=96 // loop_footer_branch
          %510 = sbr.rel target = $region99
        $region104: #{simple_encoder_pallas.1} parent=96 // loop_exit
          _
        %s518 = sshllo.u32 0, %s505
        loop: start=0, step=1, limit=1
        $region105: #{simple_encoder_pallas.1} parent=96 // loop_pre_header
          _
        $region106: #{simple_encoder_pallas.1} parent=96 // loop_header
          %s520 = sphi 0, %s524
          %p521 = scmp.ge.s32.totalorder %s520, 1
          %s525 = sphi %s507, %s507
          %s526 = sphi %s509, %s509
        $region107: #{simple_encoder_pallas.1} parent=96 // loop_header_branch
          %523 = sbr.rel (%p521) target = $region111
        $region108: #{simple_encoder_pallas.1} parent=96 // loop_body
          %v527 = vld [vmem:[%s525] sm:%s518]
          %528 = vst [vmem:[%s526] sm:%s518] %v527
          %v529 = vld [vmem:[%s525 + $0x8] sm:%s518]
          %530 = vst [vmem:[%s526 + $0x4] sm:%s518] %v529
          %v531 = vld [vmem:[%s525 + $0x4] sm:%s518]
          %532 = vst [vmem:[%s526 + $0x8] sm:%s518] %v531
          %v533 = vld [vmem:[%s525 + $0xc] sm:%s518]
          %534 = vst [vmem:[%s526 + $0xc] sm:%s518] %v533
          %v535 = vld [vmem:[%s525 + $0x10] sm:%s518]
          %536 = vst [vmem:[%s526 + $0x10] sm:%s518] %v535
          %v537 = vld [vmem:[%s525 + $0x18] sm:%s518]
          %538 = vst [vmem:[%s526 + $0x14] sm:%s518] %v537
          %v539 = vld [vmem:[%s525 + $0x14] sm:%s518]
          %540 = vst [vmem:[%s526 + $0x18] sm:%s518] %v539
          %v541 = vld [vmem:[%s525 + $0x1c] sm:%s518]
          %542 = vst [vmem:[%s526 + $0x1c] sm:%s518] %v541
          %v543 = vld [vmem:[%s525 + $0x20] sm:%s518]
          %544 = vst [vmem:[%s526 + $0x20] sm:%s518] %v543
          %v545 = vld [vmem:[%s525 + $0x28] sm:%s518]
          %546 = vst [vmem:[%s526 + $0x24] sm:%s518] %v545
          %v547 = vld [vmem:[%s525 + $0x24] sm:%s518]
          %548 = vst [vmem:[%s526 + $0x28] sm:%s518] %v547
          %v549 = vld [vmem:[%s525 + $0x2c] sm:%s518]
          %550 = vst [vmem:[%s526 + $0x2c] sm:%s518] %v549
          %v551 = vld [vmem:[%s525 + $0x30] sm:%s518]
          %552 = vst [vmem:[%s526 + $0x30] sm:%s518] %v551
          %v553 = vld [vmem:[%s525 + $0x38] sm:%s518]
          %554 = vst [vmem:[%s526 + $0x34] sm:%s518] %v553
          %v555 = vld [vmem:[%s525 + $0x34] sm:%s518]
          %556 = vst [vmem:[%s526 + $0x38] sm:%s518] %v555
          %v557 = vld [vmem:[%s525 + $0x3c] sm:%s518]
          %558 = vst [vmem:[%s526 + $0x3c] sm:%s518] %v557
          %v559 = vld [vmem:[%s525 + $0x40] sm:%s518]
          %560 = vst [vmem:[%s526 + $0x40] sm:%s518] %v559
          %v561 = vld [vmem:[%s525 + $0x48] sm:%s518]
          %562 = vst [vmem:[%s526 + $0x44] sm:%s518] %v561
          %v563 = vld [vmem:[%s525 + $0x44] sm:%s518]
          %564 = vst [vmem:[%s526 + $0x48] sm:%s518] %v563
          %v565 = vld [vmem:[%s525 + $0x4c] sm:%s518]
          %566 = vst [vmem:[%s526 + $0x4c] sm:%s518] %v565
          %v567 = vld [vmem:[%s525 + $0x50] sm:%s518]
          %568 = vst [vmem:[%s526 + $0x50] sm:%s518] %v567
          %v569 = vld [vmem:[%s525 + $0x58] sm:%s518]
          %570 = vst [vmem:[%s526 + $0x54] sm:%s518] %v569
          %v571 = vld [vmem:[%s525 + $0x54] sm:%s518]
          %572 = vst [vmem:[%s526 + $0x58] sm:%s518] %v571
          %v573 = vld [vmem:[%s525 + $0x5c] sm:%s518]
          %574 = vst [vmem:[%s526 + $0x5c] sm:%s518] %v573
          %v575 = vld [vmem:[%s525 + $0x60] sm:%s518]
          %576 = vst [vmem:[%s526 + $0x60] sm:%s518] %v575
          %v577 = vld [vmem:[%s525 + $0x68] sm:%s518]
          %578 = vst [vmem:[%s526 + $0x64] sm:%s518] %v577
          %v579 = vld [vmem:[%s525 + $0x64] sm:%s518]
          %580 = vst [vmem:[%s526 + $0x68] sm:%s518] %v579
          %v581 = vld [vmem:[%s525 + $0x6c] sm:%s518]
          %582 = vst [vmem:[%s526 + $0x6c] sm:%s518] %v581
          %v583 = vld [vmem:[%s525 + $0x70] sm:%s518]
          %584 = vst [vmem:[%s526 + $0x70] sm:%s518] %v583
          %v585 = vld [vmem:[%s525 + $0x78] sm:%s518]
          %586 = vst [vmem:[%s526 + $0x74] sm:%s518] %v585
          %v587 = vld [vmem:[%s525 + $0x74] sm:%s518]
          %588 = vst [vmem:[%s526 + $0x78] sm:%s518] %v587
          %v589 = vld [vmem:[%s525 + $0x7c] sm:%s518]
          %590 = vst [vmem:[%s526 + $0x7c] sm:%s518] %v589
          %v591 = vld [vmem:[%s525 + $0x80] sm:%s518]
          %592 = vst [vmem:[%s526 + $0x80] sm:%s518] %v591
          %v593 = vld [vmem:[%s525 + $0x88] sm:%s518]
          %594 = vst [vmem:[%s526 + $0x84] sm:%s518] %v593
          %v595 = vld [vmem:[%s525 + $0x84] sm:%s518]
          %596 = vst [vmem:[%s526 + $0x88] sm:%s518] %v595
          %v597 = vld [vmem:[%s525 + $0x8c] sm:%s518]
          %598 = vst [vmem:[%s526 + $0x8c] sm:%s518] %v597
          %v599 = vld [vmem:[%s525 + $0x90] sm:%s518]
          %600 = vst [vmem:[%s526 + $0x90] sm:%s518] %v599
          %v601 = vld [vmem:[%s525 + $0x98] sm:%s518]
          %602 = vst [vmem:[%s526 + $0x94] sm:%s518] %v601
          %v603 = vld [vmem:[%s525 + $0x94] sm:%s518]
          %604 = vst [vmem:[%s526 + $0x98] sm:%s518] %v603
          %v605 = vld [vmem:[%s525 + $0x9c] sm:%s518]
          %606 = vst [vmem:[%s526 + $0x9c] sm:%s518] %v605
          %v607 = vld [vmem:[%s525 + $0xa0] sm:%s518]
          %608 = vst [vmem:[%s526 + $0xa0] sm:%s518] %v607
          %v609 = vld [vmem:[%s525 + $0xa8] sm:%s518]
          %610 = vst [vmem:[%s526 + $0xa4] sm:%s518] %v609
          %v611 = vld [vmem:[%s525 + $0xa4] sm:%s518]
          %612 = vst [vmem:[%s526 + $0xa8] sm:%s518] %v611
          %v613 = vld [vmem:[%s525 + $0xac] sm:%s518]
          %614 = vst [vmem:[%s526 + $0xac] sm:%s518] %v613
          %v615 = vld [vmem:[%s525 + $0xb0] sm:%s518]
          %616 = vst [vmem:[%s526 + $0xb0] sm:%s518] %v615
          %v617 = vld [vmem:[%s525 + $0xb8] sm:%s518]
          %618 = vst [vmem:[%s526 + $0xb4] sm:%s518] %v617
          %v619 = vld [vmem:[%s525 + $0xb4] sm:%s518]
          %620 = vst [vmem:[%s526 + $0xb8] sm:%s518] %v619
          %v621 = vld [vmem:[%s525 + $0xbc] sm:%s518]
          %622 = vst [vmem:[%s526 + $0xbc] sm:%s518] %v621
          %v623 = vld [vmem:[%s525 + $0xc0] sm:%s518]
          %624 = vst [vmem:[%s526 + $0xc0] sm:%s518] %v623
          %v625 = vld [vmem:[%s525 + $0xc8] sm:%s518]
          %626 = vst [vmem:[%s526 + $0xc4] sm:%s518] %v625
          %v627 = vld [vmem:[%s525 + $0xc4] sm:%s518]
          %628 = vst [vmem:[%s526 + $0xc8] sm:%s518] %v627
          %v629 = vld [vmem:[%s525 + $0xcc] sm:%s518]
          %630 = vst [vmem:[%s526 + $0xcc] sm:%s518] %v629
          %v631 = vld [vmem:[%s525 + $0xd0] sm:%s518]
          %632 = vst [vmem:[%s526 + $0xd0] sm:%s518] %v631
          %v633 = vld [vmem:[%s525 + $0xd8] sm:%s518]
          %634 = vst [vmem:[%s526 + $0xd4] sm:%s518] %v633
          %v635 = vld [vmem:[%s525 + $0xd4] sm:%s518]
          %636 = vst [vmem:[%s526 + $0xd8] sm:%s518] %v635
          %v637 = vld [vmem:[%s525 + $0xdc] sm:%s518]
          %638 = vst [vmem:[%s526 + $0xdc] sm:%s518] %v637
          %v639 = vld [vmem:[%s525 + $0xe0] sm:%s518]
          %640 = vst [vmem:[%s526 + $0xe0] sm:%s518] %v639
          %v641 = vld [vmem:[%s525 + $0xe8] sm:%s518]
          %642 = vst [vmem:[%s526 + $0xe4] sm:%s518] %v641
          %v643 = vld [vmem:[%s525 + $0xe4] sm:%s518]
          %644 = vst [vmem:[%s526 + $0xe8] sm:%s518] %v643
          %v645 = vld [vmem:[%s525 + $0xec] sm:%s518]
          %646 = vst [vmem:[%s526 + $0xec] sm:%s518] %v645
          %v647 = vld [vmem:[%s525 + $0xf0] sm:%s518]
          %648 = vst [vmem:[%s526 + $0xf0] sm:%s518] %v647
          %v649 = vld [vmem:[%s525 + $0xf8] sm:%s518]
          %650 = vst [vmem:[%s526 + $0xf4] sm:%s518] %v649
          %v651 = vld [vmem:[%s525 + $0xf4] sm:%s518]
          %652 = vst [vmem:[%s526 + $0xf8] sm:%s518] %v651
          %v653 = vld [vmem:[%s525 + $0xfc] sm:%s518]
          %654 = vst [vmem:[%s526 + $0xfc] sm:%s518] %v653
        $region109: #{simple_encoder_pallas.1} parent=96 // loop_footer
          %s524 = sadd.s32 1, %s520
        $region110: #{simple_encoder_pallas.1} parent=96 // loop_footer_branch
          %519 = sbr.rel target = $region106
        $region111: #{simple_encoder_pallas.1} parent=96 // loop_exit
          _
      $region97: #{simple_encoder_pallas.1} parent=81 // pred_fallthru
        _
    $region82: #{simple_encoder_pallas.1} parent=1 // pred_fallthru
      _
    // Predicated region
    $region83: #{simple_encoder_pallas.1} parent=1 // pred_check
      %p360 = pneg %p356
    $region84: #{simple_encoder_pallas.1} parent=1 // pred_check_branch
      %362 = sbr.rel (%p360) target = $region86
    $region85: #{simple_encoder_pallas.1} parent=1 // pred_region
      %s363 = sshllo.u32 0, 4
      loop: start=0, step=1, limit=1
      $region87: #{simple_encoder_pallas.1} parent=85 // loop_pre_header
        _
      $region88: #{simple_encoder_pallas.1} parent=85 // loop_header
        %s365 = sphi 0, %s369
        %p366 = scmp.ge.s32.totalorder %s365, 1
        %s370 = sphi %s10, %s10
        %s371 = sphi [#allocation3], [#allocation3]
      $region89: #{simple_encoder_pallas.1} parent=85 // loop_header_branch
        %368 = sbr.rel (%p366) target = $region93
      $region90: #{simple_encoder_pallas.1} parent=85 // loop_body
        %v372 = vld [vmem:[%s370] sm:%s363]
        %373 = vst [vmem:[%s371] sm:%s363] %v372
        %v374 = vld [vmem:[%s370 + $0x8] sm:%s363]
        %375 = vst [vmem:[%s371 + $0x4] sm:%s363] %v374
        %v376 = vld [vmem:[%s370 + $0x4] sm:%s363]
        %377 = vst [vmem:[%s371 + $0x8] sm:%s363] %v376
        %v378 = vld [vmem:[%s370 + $0xc] sm:%s363]
        %379 = vst [vmem:[%s371 + $0xc] sm:%s363] %v378
        %v380 = vld [vmem:[%s370 + $0x10] sm:%s363]
        %381 = vst [vmem:[%s371 + $0x10] sm:%s363] %v380
        %v382 = vld [vmem:[%s370 + $0x18] sm:%s363]
        %383 = vst [vmem:[%s371 + $0x14] sm:%s363] %v382
        %v384 = vld [vmem:[%s370 + $0x14] sm:%s363]
        %385 = vst [vmem:[%s371 + $0x18] sm:%s363] %v384
        %v386 = vld [vmem:[%s370 + $0x1c] sm:%s363]
        %387 = vst [vmem:[%s371 + $0x1c] sm:%s363] %v386
        %v388 = vld [vmem:[%s370 + $0x20] sm:%s363]
        %389 = vst [vmem:[%s371 + $0x20] sm:%s363] %v388
        %v390 = vld [vmem:[%s370 + $0x28] sm:%s363]
        %391 = vst [vmem:[%s371 + $0x24] sm:%s363] %v390
        %v392 = vld [vmem:[%s370 + $0x24] sm:%s363]
        %393 = vst [vmem:[%s371 + $0x28] sm:%s363] %v392
        %v394 = vld [vmem:[%s370 + $0x2c] sm:%s363]
        %395 = vst [vmem:[%s371 + $0x2c] sm:%s363] %v394
        %v396 = vld [vmem:[%s370 + $0x30] sm:%s363]
        %397 = vst [vmem:[%s371 + $0x30] sm:%s363] %v396
        %v398 = vld [vmem:[%s370 + $0x38] sm:%s363]
        %399 = vst [vmem:[%s371 + $0x34] sm:%s363] %v398
        %v400 = vld [vmem:[%s370 + $0x34] sm:%s363]
        %401 = vst [vmem:[%s371 + $0x38] sm:%s363] %v400
        %v402 = vld [vmem:[%s370 + $0x3c] sm:%s363]
        %403 = vst [vmem:[%s371 + $0x3c] sm:%s363] %v402
        %v404 = vld [vmem:[%s370 + $0x40] sm:%s363]
        %405 = vst [vmem:[%s371 + $0x40] sm:%s363] %v404
        %v406 = vld [vmem:[%s370 + $0x48] sm:%s363]
        %407 = vst [vmem:[%s371 + $0x44] sm:%s363] %v406
        %v408 = vld [vmem:[%s370 + $0x44] sm:%s363]
        %409 = vst [vmem:[%s371 + $0x48] sm:%s363] %v408
        %v410 = vld [vmem:[%s370 + $0x4c] sm:%s363]
        %411 = vst [vmem:[%s371 + $0x4c] sm:%s363] %v410
        %v412 = vld [vmem:[%s370 + $0x50] sm:%s363]
        %413 = vst [vmem:[%s371 + $0x50] sm:%s363] %v412
        %v414 = vld [vmem:[%s370 + $0x58] sm:%s363]
        %415 = vst [vmem:[%s371 + $0x54] sm:%s363] %v414
        %v416 = vld [vmem:[%s370 + $0x54] sm:%s363]
        %417 = vst [vmem:[%s371 + $0x58] sm:%s363] %v416
        %v418 = vld [vmem:[%s370 + $0x5c] sm:%s363]
        %419 = vst [vmem:[%s371 + $0x5c] sm:%s363] %v418
        %v420 = vld [vmem:[%s370 + $0x60] sm:%s363]
        %421 = vst [vmem:[%s371 + $0x60] sm:%s363] %v420
        %v422 = vld [vmem:[%s370 + $0x68] sm:%s363]
        %423 = vst [vmem:[%s371 + $0x64] sm:%s363] %v422
        %v424 = vld [vmem:[%s370 + $0x64] sm:%s363]
        %425 = vst [vmem:[%s371 + $0x68] sm:%s363] %v424
        %v426 = vld [vmem:[%s370 + $0x6c] sm:%s363]
        %427 = vst [vmem:[%s371 + $0x6c] sm:%s363] %v426
        %v428 = vld [vmem:[%s370 + $0x70] sm:%s363]
        %429 = vst [vmem:[%s371 + $0x70] sm:%s363] %v428
        %v430 = vld [vmem:[%s370 + $0x78] sm:%s363]
        %431 = vst [vmem:[%s371 + $0x74] sm:%s363] %v430
        %v432 = vld [vmem:[%s370 + $0x74] sm:%s363]
        %433 = vst [vmem:[%s371 + $0x78] sm:%s363] %v432
        %v434 = vld [vmem:[%s370 + $0x7c] sm:%s363]
        %435 = vst [vmem:[%s371 + $0x7c] sm:%s363] %v434
        %v436 = vld [vmem:[%s370 + $0x80] sm:%s363]
        %437 = vst [vmem:[%s371 + $0x80] sm:%s363] %v436
        %v438 = vld [vmem:[%s370 + $0x88] sm:%s363]
        %439 = vst [vmem:[%s371 + $0x84] sm:%s363] %v438
        %v440 = vld [vmem:[%s370 + $0x84] sm:%s363]
        %441 = vst [vmem:[%s371 + $0x88] sm:%s363] %v440
        %v442 = vld [vmem:[%s370 + $0x8c] sm:%s363]
        %443 = vst [vmem:[%s371 + $0x8c] sm:%s363] %v442
        %v444 = vld [vmem:[%s370 + $0x90] sm:%s363]
        %445 = vst [vmem:[%s371 + $0x90] sm:%s363] %v444
        %v446 = vld [vmem:[%s370 + $0x98] sm:%s363]
        %447 = vst [vmem:[%s371 + $0x94] sm:%s363] %v446
        %v448 = vld [vmem:[%s370 + $0x94] sm:%s363]
        %449 = vst [vmem:[%s371 + $0x98] sm:%s363] %v448
        %v450 = vld [vmem:[%s370 + $0x9c] sm:%s363]
        %451 = vst [vmem:[%s371 + $0x9c] sm:%s363] %v450
        %v452 = vld [vmem:[%s370 + $0xa0] sm:%s363]
        %453 = vst [vmem:[%s371 + $0xa0] sm:%s363] %v452
        %v454 = vld [vmem:[%s370 + $0xa8] sm:%s363]
        %455 = vst [vmem:[%s371 + $0xa4] sm:%s363] %v454
        %v456 = vld [vmem:[%s370 + $0xa4] sm:%s363]
        %457 = vst [vmem:[%s371 + $0xa8] sm:%s363] %v456
        %v458 = vld [vmem:[%s370 + $0xac] sm:%s363]
        %459 = vst [vmem:[%s371 + $0xac] sm:%s363] %v458
        %v460 = vld [vmem:[%s370 + $0xb0] sm:%s363]
        %461 = vst [vmem:[%s371 + $0xb0] sm:%s363] %v460
        %v462 = vld [vmem:[%s370 + $0xb8] sm:%s363]
        %463 = vst [vmem:[%s371 + $0xb4] sm:%s363] %v462
        %v464 = vld [vmem:[%s370 + $0xb4] sm:%s363]
        %465 = vst [vmem:[%s371 + $0xb8] sm:%s363] %v464
        %v466 = vld [vmem:[%s370 + $0xbc] sm:%s363]
        %467 = vst [vmem:[%s371 + $0xbc] sm:%s363] %v466
        %v468 = vld [vmem:[%s370 + $0xc0] sm:%s363]
        %469 = vst [vmem:[%s371 + $0xc0] sm:%s363] %v468
        %v470 = vld [vmem:[%s370 + $0xc8] sm:%s363]
        %471 = vst [vmem:[%s371 + $0xc4] sm:%s363] %v470
        %v472 = vld [vmem:[%s370 + $0xc4] sm:%s363]
        %473 = vst [vmem:[%s371 + $0xc8] sm:%s363] %v472
        %v474 = vld [vmem:[%s370 + $0xcc] sm:%s363]
        %475 = vst [vmem:[%s371 + $0xcc] sm:%s363] %v474
        %v476 = vld [vmem:[%s370 + $0xd0] sm:%s363]
        %477 = vst [vmem:[%s371 + $0xd0] sm:%s363] %v476
        %v478 = vld [vmem:[%s370 + $0xd8] sm:%s363]
        %479 = vst [vmem:[%s371 + $0xd4] sm:%s363] %v478
        %v480 = vld [vmem:[%s370 + $0xd4] sm:%s363]
        %481 = vst [vmem:[%s371 + $0xd8] sm:%s363] %v480
        %v482 = vld [vmem:[%s370 + $0xdc] sm:%s363]
        %483 = vst [vmem:[%s371 + $0xdc] sm:%s363] %v482
        %v484 = vld [vmem:[%s370 + $0xe0] sm:%s363]
        %485 = vst [vmem:[%s371 + $0xe0] sm:%s363] %v484
        %v486 = vld [vmem:[%s370 + $0xe8] sm:%s363]
        %487 = vst [vmem:[%s371 + $0xe4] sm:%s363] %v486
        %v488 = vld [vmem:[%s370 + $0xe4] sm:%s363]
        %489 = vst [vmem:[%s371 + $0xe8] sm:%s363] %v488
        %v490 = vld [vmem:[%s370 + $0xec] sm:%s363]
        %491 = vst [vmem:[%s371 + $0xec] sm:%s363] %v490
        %v492 = vld [vmem:[%s370 + $0xf0] sm:%s363]
        %493 = vst [vmem:[%s371 + $0xf0] sm:%s363] %v492
        %v494 = vld [vmem:[%s370 + $0xf8] sm:%s363]
        %495 = vst [vmem:[%s371 + $0xf4] sm:%s363] %v494
        %v496 = vld [vmem:[%s370 + $0xf4] sm:%s363]
        %497 = vst [vmem:[%s371 + $0xf8] sm:%s363] %v496
        %v498 = vld [vmem:[%s370 + $0xfc] sm:%s363]
        %499 = vst [vmem:[%s371 + $0xfc] sm:%s363] %v498
      $region91: #{simple_encoder_pallas.1} parent=85 // loop_footer
        %s369 = sadd.s32 1, %s365
      $region92: #{simple_encoder_pallas.1} parent=85 // loop_footer_branch
        %364 = sbr.rel target = $region88
      $region93: #{simple_encoder_pallas.1} parent=85 // loop_exit
        _
    $region86: #{simple_encoder_pallas.1} parent=1 // pred_fallthru
      _
    // Predicated region
    $region112: #{simple_encoder_pallas.1} parent=1 // pred_check
      _
    $region113: #{simple_encoder_pallas.1} parent=1 // pred_check_branch
      %657 = sbr.rel (0) target = $region115
    $region114: #{simple_encoder_pallas.1} parent=1 // pred_region
      %658 = vsyncadd %s354, 4096
    $region115: #{simple_encoder_pallas.1} parent=1 // pred_fallthru
      _
    %s659 = scalar_lea.sflag [#allocation5], 2
    // Predicated region
    $region116: #{simple_encoder_pallas.1} parent=1 // pred_check
      _
    $region117: #{simple_encoder_pallas.1} parent=1 // pred_check_branch
      %661 = sbr.rel target = $region119
    $region118: #{simple_encoder_pallas.1} parent=1 // pred_region
      %662 = sst [smem:[#allocation12]] [#allocation11]
      %663 = sst [smem:[#allocation13]] [#allocation10]
    $region119: #{simple_encoder_pallas.1} parent=1 // pred_fallthru
      _
    %665 = shalt.err (0)
    %s667 = sshll.u32 [#allocation4], 4
    %s668 = int_to_ptr.vmem [resolvable:$true] %s667
    %670 = dma.hbm_to_vmem [thread:$0]  %s11, 2048, %s668, %s659
    %v671 = vld [vmem:[%s0] sm:$0xff]
    %v672 = vld [vmem:[%s0 + $0x8] sm:$0xff]
    %v673 = vld [vmem:[%s0 + $0x10] sm:$0xff]
    %v674 = vld [vmem:[%s0 + $0x18] sm:$0xf]
    %v675 = vld [vmem:[#allocation6] sm:$0xff]
    %v676 = vld [vmem:[#allocation6 + $0x8] sm:$0xff]
    %v677 = vld [vmem:[#allocation6 + $0x10] sm:$0xff]
    %v678 = vld [vmem:[#allocation6 + $0x18] sm:$0xff]
    %v679 = vld [vmem:[#allocation6 + $0x20] sm:$0xff]
    %v680 = vld [vmem:[#allocation6 + $0x28] sm:$0xff]
    %v681 = vld [vmem:[#allocation6 + $0x30] sm:$0xff]
    %v682 = vld [vmem:[#allocation6 + $0x38] sm:$0xff]
    %v683 = vld [vmem:[#allocation6 + $0x40] sm:$0xff]
    %v684 = vld [vmem:[#allocation6 + $0x48] sm:$0xff]
    %v685 = vld [vmem:[#allocation6 + $0x50] sm:$0xff]
    %v686 = vld [vmem:[#allocation6 + $0x58] sm:$0xff]
    %v687 = vld [vmem:[#allocation6 + $0x60] sm:$0xff]
    %v688 = vld [vmem:[#allocation6 + $0x68] sm:$0xff]
    %v689 = vld [vmem:[#allocation6 + $0x70] sm:$0xff]
    %v690 = vld [vmem:[#allocation6 + $0x78] sm:$0xff]
    %v691 = vld [vmem:[#allocation6 + $0x80] sm:$0xff]
    %v692 = vld [vmem:[#allocation6 + $0x88] sm:$0xff]
    %v693 = vld [vmem:[#allocation6 + $0x90] sm:$0xff]
    %v694 = vld [vmem:[#allocation6 + $0x98] sm:$0xff]
    %v695 = vld [vmem:[#allocation6 + $0xa0] sm:$0xff]
    %v696 = vld [vmem:[#allocation6 + $0xa8] sm:$0xff]
    %v697 = vld [vmem:[#allocation6 + $0xb0] sm:$0xff]
    %v698 = vld [vmem:[#allocation6 + $0xb8] sm:$0xff]
    %v699 = vld [vmem:[#allocation6 + $0xc0] sm:$0xff]
    %v700 = vld [vmem:[#allocation6 + $0xc8] sm:$0xff]
    %v701 = vld [vmem:[#allocation6 + $0xd0] sm:$0xff]
    %v702 = vld [vmem:[#allocation6 + $0xd8] sm:$0xff]
    %v703 = vld [vmem:[#allocation6 + $0xe0] sm:$0xff]
    %v704 = vld [vmem:[#allocation6 + $0xe8] sm:$0xff]
    %v705 = vld [vmem:[#allocation6 + $0xf0] sm:$0xff]
    %v706 = vld [vmem:[#allocation6 + $0xf8] sm:$0xff]
    %v707 = vld [vmem:[#allocation6 + $0x100] sm:$0xff]
    %v708 = vld [vmem:[#allocation6 + $0x108] sm:$0xff]
    %v709 = vld [vmem:[#allocation6 + $0x110] sm:$0xff]
    %v710 = vld [vmem:[#allocation6 + $0x118] sm:$0xff]
    %v711 = vld [vmem:[#allocation6 + $0x120] sm:$0xff]
    %v712 = vld [vmem:[#allocation6 + $0x128] sm:$0xff]
    %v713 = vld [vmem:[#allocation6 + $0x130] sm:$0xff]
    %v714 = vld [vmem:[#allocation6 + $0x138] sm:$0xff]
    %v715 = vld [vmem:[#allocation6 + $0x140] sm:$0xff]
    %v716 = vld [vmem:[#allocation6 + $0x148] sm:$0xff]
    %v717 = vld [vmem:[#allocation6 + $0x150] sm:$0xff]
    %v718 = vld [vmem:[#allocation6 + $0x158] sm:$0xff]
    %v719 = vld [vmem:[#allocation6 + $0x160] sm:$0xff]
    %v720 = vld [vmem:[#allocation6 + $0x168] sm:$0xff]
    %v721 = vld [vmem:[#allocation6 + $0x170] sm:$0xff]
    %v722 = vld [vmem:[#allocation6 + $0x178] sm:$0xff]
    %v723 = vld [vmem:[#allocation6 + $0x180] sm:$0xff]
    %v724 = vld [vmem:[#allocation6 + $0x188] sm:$0xff]
    %v725 = vld [vmem:[#allocation6 + $0x190] sm:$0xff]
    %v726 = vld [vmem:[#allocation6 + $0x198] sm:$0xff]
    %v727 = vld [vmem:[#allocation6 + $0x1a0] sm:$0xff]
    %v728 = vld [vmem:[#allocation6 + $0x1a8] sm:$0xff]
    %v729 = vld [vmem:[#allocation6 + $0x1b0] sm:$0xff]
    %v730 = vld [vmem:[#allocation6 + $0x1b8] sm:$0xff]
    %v731 = vld [vmem:[#allocation6 + $0x1c0] sm:$0xff]
    %v732 = vld [vmem:[#allocation6 + $0x1c8] sm:$0xff]
    %v733 = vld [vmem:[#allocation6 + $0x1d0] sm:$0xff]
    %v734 = vld [vmem:[#allocation6 + $0x1d8] sm:$0xff]
    %v735 = vld [vmem:[#allocation6 + $0x1e0] sm:$0xff]
    %v736 = vld [vmem:[#allocation6 + $0x1e8] sm:$0xff]
    %v737 = vld [vmem:[#allocation6 + $0x1f0] sm:$0xff]
    %v738 = vld [vmem:[#allocation6 + $0x1f8] sm:$0xff]
    %v739 = vld [vmem:[#allocation6 + $0x200] sm:$0xff]
    %v740 = vld [vmem:[#allocation6 + $0x208] sm:$0xff]
    %v741 = vld [vmem:[#allocation6 + $0x210] sm:$0xff]
    %v742 = vld [vmem:[#allocation6 + $0x218] sm:$0xff]
    %v743 = vld [vmem:[#allocation6 + $0x220] sm:$0xff]
    %v744 = vld [vmem:[#allocation6 + $0x228] sm:$0xff]
    %v745 = vld [vmem:[#allocation6 + $0x230] sm:$0xff]
    %v746 = vld [vmem:[#allocation6 + $0x238] sm:$0xff]
    %v747 = vld [vmem:[#allocation6 + $0x240] sm:$0xff]
    %v748 = vld [vmem:[#allocation6 + $0x248] sm:$0xff]
    %v749 = vld [vmem:[#allocation6 + $0x250] sm:$0xff]
    %v750 = vld [vmem:[#allocation6 + $0x258] sm:$0xff]
    %v751 = vld [vmem:[#allocation6 + $0x260] sm:$0xff]
    %v752 = vld [vmem:[#allocation6 + $0x268] sm:$0xff]
    %v753 = vld [vmem:[#allocation6 + $0x270] sm:$0xff]
    %v754 = vld [vmem:[#allocation6 + $0x278] sm:$0xff]
    %v755 = vld [vmem:[#allocation6 + $0x280] sm:$0xff]
    %v756 = vld [vmem:[#allocation6 + $0x288] sm:$0xff]
    %v757 = vld [vmem:[#allocation6 + $0x290] sm:$0xff]
    %v758 = vld [vmem:[#allocation6 + $0x298] sm:$0xff]
    %v759 = vld [vmem:[#allocation6 + $0x2a0] sm:$0xff]
    %v760 = vld [vmem:[#allocation6 + $0x2a8] sm:$0xff]
    %v761 = vld [vmem:[#allocation6 + $0x2b0] sm:$0xff]
    %v762 = vld [vmem:[#allocation6 + $0x2b8] sm:$0xff]
    %v763 = vld [vmem:[#allocation6 + $0x2c0] sm:$0xff]
    %v764 = vld [vmem:[#allocation6 + $0x2c8] sm:$0xff]
    %v765 = vld [vmem:[#allocation6 + $0x2d0] sm:$0xff]
    %v766 = vld [vmem:[#allocation6 + $0x2d8] sm:$0xff]
    %v767 = vld [vmem:[#allocation6 + $0x2e0] sm:$0xff]
    %v768 = vld [vmem:[#allocation6 + $0x2e8] sm:$0xff]
    %v769 = vld [vmem:[#allocation6 + $0x2f0] sm:$0xff]
    %v770 = vld [vmem:[#allocation6 + $0x2f8] sm:$0xff]
    %v771 = vld [vmem:[#allocation6 + $0x300] sm:$0xff]
    %v772 = vld [vmem:[#allocation6 + $0x308] sm:$0xff]
    %v773 = vld [vmem:[#allocation6 + $0x310] sm:$0xff]
    %v774 = vld [vmem:[#allocation6 + $0x318] sm:$0xff]
    %v775 = vld [vmem:[#allocation6 + $0x320] sm:$0xff]
    %v776 = vld [vmem:[#allocation6 + $0x328] sm:$0xff]
    %v777 = vld [vmem:[#allocation6 + $0x330] sm:$0xff]
    %v778 = vld [vmem:[#allocation6 + $0x338] sm:$0xff]
    %v779 = vld [vmem:[#allocation6 + $0x340] sm:$0xff]
    %v780 = vld [vmem:[#allocation6 + $0x348] sm:$0xff]
    %v781 = vld [vmem:[#allocation6 + $0x350] sm:$0xff]
    %v782 = vld [vmem:[#allocation6 + $0x358] sm:$0xff]
    %v783 = vld [vmem:[#allocation6 + $0x360] sm:$0xff]
    %v784 = vld [vmem:[#allocation6 + $0x368] sm:$0xff]
    %v785 = vld [vmem:[#allocation6 + $0x370] sm:$0xff]
    %v786 = vld [vmem:[#allocation6 + $0x378] sm:$0xff]
    %v791 = vunpack.c.l.b16 %v671
    %v792 = vunpack.c.h.b16 %v671
    %v793 = vunpack.c.l.b16 %v672
    %v794 = vunpack.c.h.b16 %v672
    %v795 = vunpack.c.l.b16 %v673
    %v796 = vunpack.c.h.b16 %v673
    %v797 = vunpack.c.l.b16 %v674
    %v798 = vpack.c.b16 %v791, %v791
    %v799 = vpack.c.b16 %v792, %v792
    %v800 = vpack.c.b16 %v793, %v793
    %v801 = vpack.c.b16 %v794, %v794
    %v802 = vpack.c.b16 %v795, %v795
    %v803 = vpack.c.b16 %v796, %v796
    %v804 = vpack.c.b16 %v797, %v797
    %v924 = vunpack.c.l.b16 %v675
    %v925 = vunpack.c.h.b16 %v675
    %v926 = vunpack.c.l.b16 %v676
    %v927 = vunpack.c.h.b16 %v676
    %v928 = vunpack.c.l.b16 %v677
    %v929 = vunpack.c.h.b16 %v677
    %v930 = vunpack.c.l.b16 %v678
    %v931 = vunpack.c.h.b16 %v678
    %v932 = vunpack.c.l.b16 %v679
    %v933 = vunpack.c.h.b16 %v679
    %v934 = vunpack.c.l.b16 %v680
    %v935 = vunpack.c.h.b16 %v680
    %v936 = vunpack.c.l.b16 %v681
    %v937 = vunpack.c.h.b16 %v681
    %v938 = vunpack.c.l.b16 %v682
    %v939 = vunpack.c.h.b16 %v682
    %v940 = vunpack.c.l.b16 %v683
    %v941 = vunpack.c.h.b16 %v683
    %v942 = vunpack.c.l.b16 %v684
    %v943 = vunpack.c.h.b16 %v684
    %v944 = vunpack.c.l.b16 %v685
    %v945 = vunpack.c.h.b16 %v685
    %v946 = vunpack.c.l.b16 %v686
    %v947 = vunpack.c.h.b16 %v686
    %v948 = vunpack.c.l.b16 %v687
    %v949 = vunpack.c.h.b16 %v687
    %v950 = vunpack.c.l.b16 %v688
    %v951 = vunpack.c.h.b16 %v688
    %v952 = vunpack.c.l.b16 %v689
    %v953 = vunpack.c.h.b16 %v689
    %v954 = vunpack.c.l.b16 %v690
    %v955 = vunpack.c.h.b16 %v690
    %v956 = vunpack.c.l.b16 %v691
    %v957 = vunpack.c.h.b16 %v691
    %v958 = vunpack.c.l.b16 %v692
    %v959 = vunpack.c.h.b16 %v692
    %v960 = vunpack.c.l.b16 %v693
    %v961 = vunpack.c.h.b16 %v693
    %v962 = vunpack.c.l.b16 %v694
    %v963 = vunpack.c.h.b16 %v694
    %v964 = vunpack.c.l.b16 %v695
    %v965 = vunpack.c.h.b16 %v695
    %v966 = vunpack.c.l.b16 %v696
    %v967 = vunpack.c.h.b16 %v696
    %v968 = vunpack.c.l.b16 %v697
    %v969 = vunpack.c.h.b16 %v697
    %v970 = vunpack.c.l.b16 %v698
    %v971 = vunpack.c.h.b16 %v698
    %v972 = vunpack.c.l.b16 %v699
    %v973 = vunpack.c.h.b16 %v699
    %v974 = vunpack.c.l.b16 %v700
    %v975 = vunpack.c.h.b16 %v700
    %v976 = vunpack.c.l.b16 %v701
    %v977 = vunpack.c.h.b16 %v701
    %v978 = vunpack.c.l.b16 %v702
    %v979 = vunpack.c.h.b16 %v702
    %v980 = vunpack.c.l.b16 %v703
    %v981 = vunpack.c.h.b16 %v703
    %v982 = vunpack.c.l.b16 %v704
    %v983 = vunpack.c.h.b16 %v704
    %v984 = vunpack.c.l.b16 %v705
    %v985 = vunpack.c.h.b16 %v705
    %v986 = vunpack.c.l.b16 %v706
    %v987 = vunpack.c.h.b16 %v706
    %v988 = vunpack.c.l.b16 %v707
    %v989 = vunpack.c.h.b16 %v707
    %v990 = vunpack.c.l.b16 %v708
    %v991 = vunpack.c.h.b16 %v708
    %v992 = vunpack.c.l.b16 %v709
    %v993 = vunpack.c.h.b16 %v709
    %v994 = vunpack.c.l.b16 %v710
    %v995 = vunpack.c.h.b16 %v710
    %v996 = vunpack.c.l.b16 %v711
    %v997 = vunpack.c.h.b16 %v711
    %v998 = vunpack.c.l.b16 %v712
    %v999 = vunpack.c.h.b16 %v712
    %v1000 = vunpack.c.l.b16 %v713
    %v1001 = vunpack.c.h.b16 %v713
    %v1002 = vunpack.c.l.b16 %v714
    %v1003 = vunpack.c.h.b16 %v714
    %v1004 = vunpack.c.l.b16 %v715
    %v1005 = vunpack.c.h.b16 %v715
    %v1006 = vunpack.c.l.b16 %v716
    %v1007 = vunpack.c.h.b16 %v716
    %v1008 = vunpack.c.l.b16 %v717
    %v1009 = vunpack.c.h.b16 %v717
    %v1010 = vunpack.c.l.b16 %v718
    %v1011 = vunpack.c.h.b16 %v718
    %v1012 = vunpack.c.l.b16 %v719
    %v1013 = vunpack.c.h.b16 %v719
    %v1014 = vunpack.c.l.b16 %v720
    %v1015 = vunpack.c.h.b16 %v720
    %v1016 = vunpack.c.l.b16 %v721
    %v1017 = vunpack.c.h.b16 %v721
    %v1018 = vunpack.c.l.b16 %v722
    %v1019 = vunpack.c.h.b16 %v722
    %v1020 = vunpack.c.l.b16 %v723
    %v1021 = vunpack.c.h.b16 %v723
    %v1022 = vunpack.c.l.b16 %v724
    %v1023 = vunpack.c.h.b16 %v724
    %v1024 = vunpack.c.l.b16 %v725
    %v1025 = vunpack.c.h.b16 %v725
    %v1026 = vunpack.c.l.b16 %v726
    %v1027 = vunpack.c.h.b16 %v726
    %v1028 = vunpack.c.l.b16 %v727
    %v1029 = vunpack.c.h.b16 %v727
    %v1030 = vunpack.c.l.b16 %v728
    %v1031 = vunpack.c.h.b16 %v728
    %v1032 = vunpack.c.l.b16 %v729
    %v1033 = vunpack.c.h.b16 %v729
    %v1034 = vunpack.c.l.b16 %v730
    %v1035 = vunpack.c.h.b16 %v730
    %v1036 = vunpack.c.l.b16 %v731
    %v1037 = vunpack.c.h.b16 %v731
    %v1038 = vunpack.c.l.b16 %v732
    %v1039 = vunpack.c.h.b16 %v732
    %v1040 = vunpack.c.l.b16 %v733
    %v1041 = vunpack.c.h.b16 %v733
    %v1042 = vunpack.c.l.b16 %v734
    %v1043 = vunpack.c.h.b16 %v734
    %v1044 = vunpack.c.l.b16 %v735
    %v1045 = vunpack.c.h.b16 %v735
    %v1046 = vunpack.c.l.b16 %v736
    %v1047 = vunpack.c.h.b16 %v736
    %v1048 = vunpack.c.l.b16 %v737
    %v1049 = vunpack.c.h.b16 %v737
    %v1050 = vunpack.c.l.b16 %v738
    %v1051 = vunpack.c.h.b16 %v738
    %v1052 = vunpack.c.l.b16 %v739
    %v1053 = vunpack.c.h.b16 %v739
    %v1054 = vunpack.c.l.b16 %v740
    %v1055 = vunpack.c.h.b16 %v740
    %v1056 = vunpack.c.l.b16 %v741
    %v1057 = vunpack.c.h.b16 %v741
    %v1058 = vunpack.c.l.b16 %v742
    %v1059 = vunpack.c.h.b16 %v742
    %v1060 = vunpack.c.l.b16 %v743
    %v1061 = vunpack.c.h.b16 %v743
    %v1062 = vunpack.c.l.b16 %v744
    %v1063 = vunpack.c.h.b16 %v744
    %v1064 = vunpack.c.l.b16 %v745
    %v1065 = vunpack.c.h.b16 %v745
    %v1066 = vunpack.c.l.b16 %v746
    %v1067 = vunpack.c.h.b16 %v746
    %v1068 = vunpack.c.l.b16 %v747
    %v1069 = vunpack.c.h.b16 %v747
    %v1070 = vunpack.c.l.b16 %v748
    %v1071 = vunpack.c.h.b16 %v748
    %v1072 = vunpack.c.l.b16 %v749
    %v1073 = vunpack.c.h.b16 %v749
    %v1074 = vunpack.c.l.b16 %v750
    %v1075 = vunpack.c.h.b16 %v750
    %v1076 = vunpack.c.l.b16 %v751
    %v1077 = vunpack.c.h.b16 %v751
    %v1078 = vunpack.c.l.b16 %v752
    %v1079 = vunpack.c.h.b16 %v752
    %v1080 = vunpack.c.l.b16 %v753
    %v1081 = vunpack.c.h.b16 %v753
    %v1082 = vunpack.c.l.b16 %v754
    %v1083 = vunpack.c.h.b16 %v754
    %v1084 = vunpack.c.l.b16 %v755
    %v1085 = vunpack.c.h.b16 %v755
    %v1086 = vunpack.c.l.b16 %v756
    %v1087 = vunpack.c.h.b16 %v756
    %v1088 = vunpack.c.l.b16 %v757
    %v1089 = vunpack.c.h.b16 %v757
    %v1090 = vunpack.c.l.b16 %v758
    %v1091 = vunpack.c.h.b16 %v758
    %v1092 = vunpack.c.l.b16 %v759
    %v1093 = vunpack.c.h.b16 %v759
    %v1094 = vunpack.c.l.b16 %v760
    %v1095 = vunpack.c.h.b16 %v760
    %v1096 = vunpack.c.l.b16 %v761
    %v1097 = vunpack.c.h.b16 %v761
    %v1098 = vunpack.c.l.b16 %v762
    %v1099 = vunpack.c.h.b16 %v762
    %v1100 = vunpack.c.l.b16 %v763
    %v1101 = vunpack.c.h.b16 %v763
    %v1102 = vunpack.c.l.b16 %v764
    %v1103 = vunpack.c.h.b16 %v764
    %v1104 = vunpack.c.l.b16 %v765
    %v1105 = vunpack.c.h.b16 %v765
    %v1106 = vunpack.c.l.b16 %v766
    %v1107 = vunpack.c.h.b16 %v766
    %v1108 = vunpack.c.l.b16 %v767
    %v1109 = vunpack.c.h.b16 %v767
    %v1110 = vunpack.c.l.b16 %v768
    %v1111 = vunpack.c.h.b16 %v768
    %v1112 = vunpack.c.l.b16 %v769
    %v1113 = vunpack.c.h.b16 %v769
    %v1114 = vunpack.c.l.b16 %v770
    %v1115 = vunpack.c.h.b16 %v770
    %v1116 = vunpack.c.l.b16 %v771
    %v1117 = vunpack.c.h.b16 %v771
    %v1118 = vunpack.c.l.b16 %v772
    %v1119 = vunpack.c.h.b16 %v772
    %v1120 = vunpack.c.l.b16 %v773
    %v1121 = vunpack.c.h.b16 %v773
    %v1122 = vunpack.c.l.b16 %v774
    %v1123 = vunpack.c.h.b16 %v774
    %v1124 = vunpack.c.l.b16 %v775
    %v1125 = vunpack.c.h.b16 %v775
    %v1126 = vunpack.c.l.b16 %v776
    %v1127 = vunpack.c.h.b16 %v776
    %v1128 = vunpack.c.l.b16 %v777
    %v1129 = vunpack.c.h.b16 %v777
    %v1130 = vunpack.c.l.b16 %v778
    %v1131 = vunpack.c.h.b16 %v778
    %v1132 = vunpack.c.l.b16 %v779
    %v1133 = vunpack.c.h.b16 %v779
    %v1134 = vunpack.c.l.b16 %v780
    %v1135 = vunpack.c.h.b16 %v780
    %v1136 = vunpack.c.l.b16 %v781
    %v1137 = vunpack.c.h.b16 %v781
    %v1138 = vunpack.c.l.b16 %v782
    %v1139 = vunpack.c.h.b16 %v782
    %v1140 = vunpack.c.l.b16 %v783
    %v1141 = vunpack.c.h.b16 %v783
    %v1142 = vunpack.c.l.b16 %v784
    %v1143 = vunpack.c.h.b16 %v784
    %v1144 = vunpack.c.l.b16 %v785
    %v1145 = vunpack.c.h.b16 %v785
    %v1146 = vunpack.c.l.b16 %v786
    %v1147 = vunpack.c.h.b16 %v786
    %v1148 = vpack.c.b16 %v926, %v924
    %v1149 = vpack.c.b16 %v927, %v925
    %v1150 = vpack.c.b16 %v930, %v928
    %v1151 = vpack.c.b16 %v931, %v929
    %v1152 = vpack.c.b16 %v934, %v932
    %v1153 = vpack.c.b16 %v935, %v933
    %v1154 = vpack.c.b16 %v938, %v936
    %v1155 = vpack.c.b16 %v939, %v937
    %v1156 = vpack.c.b16 %v942, %v940
    %v1157 = vpack.c.b16 %v943, %v941
    %v1158 = vpack.c.b16 %v946, %v944
    %v1159 = vpack.c.b16 %v947, %v945
    %v1160 = vpack.c.b16 %v950, %v948
    %v1161 = vpack.c.b16 %v951, %v949
    %v1162 = vpack.c.b16 %v954, %v952
    %v1163 = vpack.c.b16 %v955, %v953
    %v1164 = vpack.c.b16 %v958, %v956
    %v1165 = vpack.c.b16 %v959, %v957
    %v1166 = vpack.c.b16 %v962, %v960
    %v1167 = vpack.c.b16 %v963, %v961
    %v1168 = vpack.c.b16 %v966, %v964
    %v1169 = vpack.c.b16 %v967, %v965
    %v1170 = vpack.c.b16 %v970, %v968
    %v1171 = vpack.c.b16 %v971, %v969
    %v1172 = vpack.c.b16 %v974, %v972
    %v1173 = vpack.c.b16 %v975, %v973
    %v1174 = vpack.c.b16 %v978, %v976
    %v1175 = vpack.c.b16 %v979, %v977
    %v1176 = vpack.c.b16 %v982, %v980
    %v1177 = vpack.c.b16 %v983, %v981
    %v1178 = vpack.c.b16 %v986, %v984
    %v1179 = vpack.c.b16 %v987, %v985
    %v1180 = vpack.c.b16 %v990, %v988
    %v1181 = vpack.c.b16 %v991, %v989
    %v1182 = vpack.c.b16 %v994, %v992
    %v1183 = vpack.c.b16 %v995, %v993
    %v1184 = vpack.c.b16 %v998, %v996
    %v1185 = vpack.c.b16 %v999, %v997
    %v1186 = vpack.c.b16 %v1002, %v1000
    %v1187 = vpack.c.b16 %v1003, %v1001
    %v1188 = vpack.c.b16 %v1006, %v1004
    %v1189 = vpack.c.b16 %v1007, %v1005
    %v1190 = vpack.c.b16 %v1010, %v1008
    %v1191 = vpack.c.b16 %v1011, %v1009
    %v1192 = vpack.c.b16 %v1014, %v1012
    %v1193 = vpack.c.b16 %v1015, %v1013
    %v1194 = vpack.c.b16 %v1018, %v1016
    %v1195 = vpack.c.b16 %v1019, %v1017
    %v1196 = vpack.c.b16 %v1022, %v1020
    %v1197 = vpack.c.b16 %v1023, %v1021
    %v1198 = vpack.c.b16 %v1026, %v1024
    %v1199 = vpack.c.b16 %v1027, %v1025
    %v1200 = vpack.c.b16 %v1030, %v1028
    %v1201 = vpack.c.b16 %v1031, %v1029
    %v1202 = vpack.c.b16 %v1034, %v1032
    %v1203 = vpack.c.b16 %v1035, %v1033
    %v1204 = vpack.c.b16 %v1038, %v1036
    %v1205 = vpack.c.b16 %v1039, %v1037
    %v1206 = vpack.c.b16 %v1042, %v1040
    %v1207 = vpack.c.b16 %v1043, %v1041
    %v1208 = vpack.c.b16 %v1046, %v1044
    %v1209 = vpack.c.b16 %v1047, %v1045
    %v1210 = vpack.c.b16 %v1050, %v1048
    %v1211 = vpack.c.b16 %v1051, %v1049
    %v1212 = vpack.c.b16 %v1054, %v1052
    %v1213 = vpack.c.b16 %v1055, %v1053
    %v1214 = vpack.c.b16 %v1058, %v1056
    %v1215 = vpack.c.b16 %v1059, %v1057
    %v1216 = vpack.c.b16 %v1062, %v1060
    %v1217 = vpack.c.b16 %v1063, %v1061
    %v1218 = vpack.c.b16 %v1066, %v1064
    %v1219 = vpack.c.b16 %v1067, %v1065
    %v1220 = vpack.c.b16 %v1070, %v1068
    %v1221 = vpack.c.b16 %v1071, %v1069
    %v1222 = vpack.c.b16 %v1074, %v1072
    %v1223 = vpack.c.b16 %v1075, %v1073
    %v1224 = vpack.c.b16 %v1078, %v1076
    %v1225 = vpack.c.b16 %v1079, %v1077
    %v1226 = vpack.c.b16 %v1082, %v1080
    %v1227 = vpack.c.b16 %v1083, %v1081
    %v1228 = vpack.c.b16 %v1086, %v1084
    %v1229 = vpack.c.b16 %v1087, %v1085
    %v1230 = vpack.c.b16 %v1090, %v1088
    %v1231 = vpack.c.b16 %v1091, %v1089
    %v1232 = vpack.c.b16 %v1094, %v1092
    %v1233 = vpack.c.b16 %v1095, %v1093
    %v1234 = vpack.c.b16 %v1098, %v1096
    %v1235 = vpack.c.b16 %v1099, %v1097
    %v1236 = vpack.c.b16 %v1102, %v1100
    %v1237 = vpack.c.b16 %v1103, %v1101
    %v1238 = vpack.c.b16 %v1106, %v1104
    %v1239 = vpack.c.b16 %v1107, %v1105
    %v1240 = vpack.c.b16 %v1110, %v1108
    %v1241 = vpack.c.b16 %v1111, %v1109
    %v1242 = vpack.c.b16 %v1114, %v1112
    %v1243 = vpack.c.b16 %v1115, %v1113
    %v1244 = vpack.c.b16 %v1118, %v1116
    %v1245 = vpack.c.b16 %v1119, %v1117
    %v1246 = vpack.c.b16 %v1122, %v1120
    %v1247 = vpack.c.b16 %v1123, %v1121
    %v1248 = vpack.c.b16 %v1126, %v1124
    %v1249 = vpack.c.b16 %v1127, %v1125
    %v1250 = vpack.c.b16 %v1130, %v1128
    %v1251 = vpack.c.b16 %v1131, %v1129
    %v1252 = vpack.c.b16 %v1134, %v1132
    %v1253 = vpack.c.b16 %v1135, %v1133
    %v1254 = vpack.c.b16 %v1138, %v1136
    %v1255 = vpack.c.b16 %v1139, %v1137
    %v1256 = vpack.c.b16 %v1142, %v1140
    %v1257 = vpack.c.b16 %v1143, %v1141
    %v1258 = vpack.c.b16 %v1146, %v1144
    %v1259 = vpack.c.b16 %v1147, %v1145
    %1372 = vmatprep.subr.bf16.mxu0 %v1149
    %1373 = vmatpush1.bf16.msra.mxu0 %v1148
    %1374 = vmatprep.subr.bf16.mxu0 %v1151
    %1375 = vmatpush1.bf16.msra.mxu0 %v1150
    %1376 = vmatprep.subr.bf16.mxu0 %v1153
    %1377 = vmatpush1.bf16.msra.mxu0 %v1152
    %1378 = vmatprep.subr.bf16.mxu0 %v1155
    %1379 = vmatpush1.bf16.msra.mxu0 %v1154
    %1380 = vmatprep.subr.bf16.mxu0 %v1157
    %1381 = vmatpush1.bf16.msra.mxu0 %v1156
    %1382 = vmatprep.subr.bf16.mxu0 %v1159
    %1383 = vmatpush1.bf16.msra.mxu0 %v1158
    %1384 = vmatprep.subr.bf16.mxu0 %v1161
    %1385 = vmatpush1.bf16.msra.mxu0 %v1160
    %1386 = vmatprep.subr.bf16.mxu0 %v1163
    %1387 = vmatpush1.bf16.msra.mxu0 %v1162
    %1388 = vmatprep.subr.bf16.mxu0 %v1165
    %1389 = vmatpush1.bf16.msra.mxu0 %v1164
    %1390 = vmatprep.subr.bf16.mxu0 %v1167
    %1391 = vmatpush1.bf16.msra.mxu0 %v1166
    %1392 = vmatprep.subr.bf16.mxu0 %v1169
    %1393 = vmatpush1.bf16.msra.mxu0 %v1168
    %1394 = vmatprep.subr.bf16.mxu0 %v1171
    %1395 = vmatpush1.bf16.msra.mxu0 %v1170
    %1396 = vmatprep.subr.bf16.mxu0 %v1173
    %1397 = vmatpush1.bf16.msra.mxu0 %v1172
    %1398 = vmatprep.subr.bf16.mxu0 %v1175
    %1399 = vmatpush1.bf16.msra.mxu0 %v1174
    %1400 = vmatprep.subr.bf16.mxu0 %v1177
    %1401 = vmatpush1.bf16.msra.mxu0 %v1176
    %1402 = vmatprep.subr.bf16.mxu0 %v1179
    %1403 = vmatpush1.bf16.msra.mxu0 %v1178
    %1404 = vmatprep.mubr.bf16.mxu0 %v799
    %1405 = vmatmul.mubr.bf16.gmra.mrb[0].mxu0 %v798
    %v1406 = vpop.f32.mrb[0].mxu0
    %v1407 = vadd.f32 0.0, %v1406
    %v1408 = vpop.f32.mrb[0].mxu0
    %v1409 = vadd.f32 0.0, %v1408
    %v1410 = vpop.f32.mrb[0].mxu0
    %v1411 = vpop.f32.mrb[0].mxu0
    %1412 = vdwg.mxu0
    %1413 = vmatprep.subr.bf16.mxu0 %v1181
    %1414 = vmatpush1.bf16.msra.mxu0 %v1180
    %1415 = vmatprep.subr.bf16.mxu0 %v1183
    %1416 = vmatpush1.bf16.msra.mxu0 %v1182
    %1417 = vmatprep.subr.bf16.mxu0 %v1185
    %1418 = vmatpush1.bf16.msra.mxu0 %v1184
    %1419 = vmatprep.subr.bf16.mxu0 %v1187
    %1420 = vmatpush1.bf16.msra.mxu0 %v1186
    %1421 = vmatprep.subr.bf16.mxu0 %v1189
    %1422 = vmatpush1.bf16.msra.mxu0 %v1188
    %1423 = vmatprep.subr.bf16.mxu0 %v1191
    %1424 = vmatpush1.bf16.msra.mxu0 %v1190
    %1425 = vmatprep.subr.bf16.mxu0 %v1193
    %1426 = vmatpush1.bf16.msra.mxu0 %v1192
    %1427 = vmatprep.subr.bf16.mxu0 %v1195
    %1428 = vmatpush1.bf16.msra.mxu0 %v1194
    %1429 = vmatprep.subr.bf16.mxu0 %v1197
    %1430 = vmatpush1.bf16.msra.mxu0 %v1196
    %1431 = vmatprep.subr.bf16.mxu0 %v1199
    %1432 = vmatpush1.bf16.msra.mxu0 %v1198
    %1433 = vmatprep.subr.bf16.mxu0 %v1201
    %1434 = vmatpush1.bf16.msra.mxu0 %v1200
    %1435 = vmatprep.subr.bf16.mxu0 %v1203
    %1436 = vmatpush1.bf16.msra.mxu0 %v1202
    %1437 = vmatprep.subr.bf16.mxu0 %v1205
    %1438 = vmatpush1.bf16.msra.mxu0 %v1204
    %1439 = vmatprep.subr.bf16.mxu0 %v1207
    %1440 = vmatpush1.bf16.msra.mxu0 %v1206
    %1441 = vmatprep.subr.bf16.mxu0 %v1209
    %1442 = vmatpush1.bf16.msra.mxu0 %v1208
    %1443 = vmatprep.subr.bf16.mxu0 %v1211
    %1444 = vmatpush1.bf16.msra.mxu0 %v1210
    %1445 = vmatprep.mubr.bf16.mxu0 %v801
    %1446 = vmatmul.mubr.bf16.gmra.mrb[0].mxu0 %v800
    %v1447 = vpop.f32.mrb[0].mxu0
    %v1448 = vadd.f32 %v1407, %v1447
    %v1449 = vpop.f32.mrb[0].mxu0
    %v1450 = vadd.f32 %v1409, %v1449
    %v1451 = vpop.f32.mrb[0].mxu0
    %v1452 = vpop.f32.mrb[0].mxu0
    %1453 = vdwg.mxu0
    %1454 = vmatprep.subr.bf16.mxu0 %v1213
    %1455 = vmatpush1.bf16.msra.mxu0 %v1212
    %1456 = vmatprep.subr.bf16.mxu0 %v1215
    %1457 = vmatpush1.bf16.msra.mxu0 %v1214
    %1458 = vmatprep.subr.bf16.mxu0 %v1217
    %1459 = vmatpush1.bf16.msra.mxu0 %v1216
    %1460 = vmatprep.subr.bf16.mxu0 %v1219
    %1461 = vmatpush1.bf16.msra.mxu0 %v1218
    %1462 = vmatprep.subr.bf16.mxu0 %v1221
    %1463 = vmatpush1.bf16.msra.mxu0 %v1220
    %1464 = vmatprep.subr.bf16.mxu0 %v1223
    %1465 = vmatpush1.bf16.msra.mxu0 %v1222
    %1466 = vmatprep.subr.bf16.mxu0 %v1225
    %1467 = vmatpush1.bf16.msra.mxu0 %v1224
    %1468 = vmatprep.subr.bf16.mxu0 %v1227
    %1469 = vmatpush1.bf16.msra.mxu0 %v1226
    %1470 = vmatprep.subr.bf16.mxu0 %v1229
    %1471 = vmatpush1.bf16.msra.mxu0 %v1228
    %1472 = vmatprep.subr.bf16.mxu0 %v1231
    %1473 = vmatpush1.bf16.msra.mxu0 %v1230
    %1474 = vmatprep.subr.bf16.mxu0 %v1233
    %1475 = vmatpush1.bf16.msra.mxu0 %v1232
    %1476 = vmatprep.subr.bf16.mxu0 %v1235
    %1477 = vmatpush1.bf16.msra.mxu0 %v1234
    %1478 = vmatprep.subr.bf16.mxu0 %v1237
    %1479 = vmatpush1.bf16.msra.mxu0 %v1236
    %1480 = vmatprep.subr.bf16.mxu0 %v1239
    %1481 = vmatpush1.bf16.msra.mxu0 %v1238
    %1482 = vmatprep.subr.bf16.mxu0 %v1241
    %1483 = vmatpush1.bf16.msra.mxu0 %v1240
    %1484 = vmatprep.subr.bf16.mxu0 %v1243
    %1485 = vmatpush1.bf16.msra.mxu0 %v1242
    %1486 = vmatprep.mubr.bf16.mxu0 %v803
    %1487 = vmatmul.mubr.bf16.gmra.mrb[0].mxu0 %v802
    %v1488 = vpop.f32.mrb[0].mxu0
    %v1489 = vadd.f32 %v1448, %v1488
    %v1490 = vpop.f32.mrb[0].mxu0
    %v1491 = vadd.f32 %v1450, %v1490
    %v1492 = vpop.f32.mrb[0].mxu0
    %v1493 = vpop.f32.mrb[0].mxu0
    %1494 = vdwg.mxu0
    %1495 = vmatprep.subr.bf16.mxu0 %v1245
    %1496 = vmatpush1.bf16.msra.mxu0 %v1244
    %1497 = vmatprep.subr.bf16.mxu0 %v1247
    %1498 = vmatpush1.bf16.msra.mxu0 %v1246
    %1499 = vmatprep.subr.bf16.mxu0 %v1249
    %1500 = vmatpush1.bf16.msra.mxu0 %v1248
    %1501 = vmatprep.subr.bf16.mxu0 %v1251
    %1502 = vmatpush1.bf16.msra.mxu0 %v1250
    %1503 = vmatprep.subr.bf16.mxu0 %v1253
    %1504 = vmatpush1.bf16.msra.mxu0 %v1252
    %1505 = vmatprep.subr.bf16.mxu0 %v1255
    %1506 = vmatpush1.bf16.msra.mxu0 %v1254
    %1507 = vmatprep.subr.bf16.mxu0 %v1257
    %1508 = vmatpush1.bf16.msra.mxu0 %v1256
    %1509 = vmatprep.subr.bf16.mxu0 %v1259
    %1510 = vmatpush1.bf16.msra.mxu0 %v1258
    %1511 = vmatprep.subr.bf16.mxu0 0
    %1512 = vmatpush1.bf16.msra.mxu0 0
    %1513 = vmatprep.subr.bf16.mxu0 0
    %1514 = vmatpush1.bf16.msra.mxu0 0
    %1515 = vmatprep.subr.bf16.mxu0 0
    %1516 = vmatpush1.bf16.msra.mxu0 0
    %1517 = vmatprep.subr.bf16.mxu0 0
    %1518 = vmatpush1.bf16.msra.mxu0 0
    %1519 = vmatprep.subr.bf16.mxu0 0
    %1520 = vmatpush1.bf16.msra.mxu0 0
    %1521 = vmatprep.subr.bf16.mxu0 0
    %1522 = vmatpush1.bf16.msra.mxu0 0
    %1523 = vmatprep.subr.bf16.mxu0 0
    %1524 = vmatpush1.bf16.msra.mxu0 0
    %1525 = vmatprep.subr.bf16.mxu0 0
    %1526 = vmatpush1.bf16.msra.mxu0 0
    %1527 = vmatprep.mubr.bf16.mxu0 0
    %1528 = vmatmul.mubr.bf16.gmra.mrb[0].mxu0 %v804
    %v1529 = vpop.f32.mrb[0].mxu0
    %v1530 = vadd.f32 %v1489, %v1529
    %v1531 = vpop.f32.mrb[0].mxu0
    %v1532 = vadd.f32 %v1491, %v1531
    %v1533 = vpop.f32.mrb[0].mxu0
    %v1534 = vpop.f32.mrb[0].mxu0
    %1535 = vdwg.mxu0
    %v1536 = vrot.slane %v1530, 4
    %v1537 = vadd.f32 %v1530, %v1536
    %v1538 = vrot.slane %v1537, 2
    %v1539 = vadd.f32 %v1537, %v1538
    %v1540 = vrot.slane %v1539, 1
    %v1541 = vadd.f32 %v1539, %v1540
    %v1542 = vrot.slane %v1532, 4
    %v1543 = vadd.f32 %v1532, %v1542
    %v1544 = vrot.slane %v1543, 2
    %v1545 = vadd.f32 %v1543, %v1544
    %v1546 = vrot.slane %v1545, 1
    %v1547 = vadd.f32 %v1545, %v1546
    %v1548 = vrcp.pop 8.0
    %v1549 = vmul.f32 %v1541, %v1548
    %v1550 = vmul.f32 %v1547, %v1548
    %v1551 = vsub.f32 %v1530, %v1549
    %v1552 = vsub.f32 %v1532, %v1550
    %v1553 = vmul.f32 %v1551, %v1551
    %v1554 = vmul.f32 %v1552, %v1552
    %v1555 = vrot.slane %v1553, 4
    %v1556 = vadd.f32 %v1553, %v1555
    %v1557 = vrot.slane %v1556, 2
    %v1558 = vadd.f32 %v1556, %v1557
    %v1559 = vrot.slane %v1558, 1
    %v1560 = vadd.f32 %v1558, %v1559
    %v1561 = vrot.slane %v1554, 4
    %v1562 = vadd.f32 %v1554, %v1561
    %v1563 = vrot.slane %v1562, 2
    %v1564 = vadd.f32 %v1562, %v1563
    %v1565 = vrot.slane %v1564, 1
    %v1566 = vadd.f32 %v1564, %v1565
    %v1567 = vmul.f32 %v1560, %v1548
    %v1568 = vmul.f32 %v1566, %v1548
    %v1569 = vld [vmem:[%s2] sm:$0x3]
    %v1570 = vadd.f32 %v1567, 1e-05
    %v1571 = vadd.f32 %v1568, 1e-05
    %v1572 = vrsqrt.pop %v1570
    %v1573 = vrsqrt.pop %v1571
    %v1576 = vcombine.low %v1572, %v1573
    %v1578 = vunpack.c.l.s4 1966171168
    %v1579 = vunpack.c.0.s8 %v1578
    %v1580 = vlaneseq
    %v1581 = vshrl.u32 %v1580, 7
    %v1582 = vsub.s32 %v1579, %v1581
    %v1583 = vrot.slane %v1576, %v1582
    %v1585 = vunpack.c.l.s4 1966171168
    %v1586 = vunpack.c.0.s8 %v1585
    %v1587 = vlaneseq
    %v1588 = vshrl.u32 %v1587, 7
    %v1589 = vsub.s32 %v1586, %v1588
    %v1590 = vrot.slane %v1583, %v1589
    %v1592 = vmul.f32 %v1569, %v1590
    %v1593 = vld [vmem:[%s3] sm:$0x3]
    %v1595 = vlaneseq
    %v1596 = vshrl.u32 %v1595, 7
    %v1597 = vsub.s32 0, %v1596
    %v1598 = vrot.slane %v1592, %v1597
    %v1599 = vlaneseq
    %v1600 = vshrl.u32 %v1599, 7
    %v1601 = vsub.s32 1, %v1600
    %v1602 = vrot.slane %v1592, %v1601
    %v1605 = vmul.f32 %v1549, %v1598
    %v1606 = vmul.f32 %v1550, %v1602
    %v1609 = vcombine.low %v1605, %v1606
    %v1611 = vunpack.c.l.s4 1966171168
    %v1612 = vunpack.c.0.s8 %v1611
    %v1613 = vlaneseq
    %v1614 = vshrl.u32 %v1613, 7
    %v1615 = vsub.s32 %v1612, %v1614
    %v1616 = vrot.slane %v1609, %v1615
    %v1618 = vunpack.c.l.s4 1966171168
    %v1619 = vunpack.c.0.s8 %v1618
    %v1620 = vlaneseq
    %v1621 = vshrl.u32 %v1620, 7
    %v1622 = vsub.s32 %v1619, %v1621
    %v1623 = vrot.slane %v1616, %v1622
    %v1625 = vsub.f32 %v1593, %v1623
    %v1626 = vmul.f32 %v1530, %v1598
    %v1627 = vmul.f32 %v1532, %v1602
    %v1629 = vlaneseq
    %v1630 = vshrl.u32 %v1629, 7
    %v1631 = vsub.s32 0, %v1630
    %v1632 = vrot.slane %v1625, %v1631
    %v1633 = vlaneseq
    %v1634 = vshrl.u32 %v1633, 7
    %v1635 = vsub.s32 1, %v1634
    %v1636 = vrot.slane %v1625, %v1635
    %v1639 = vadd.f32 %v1626, %v1632
    %v1640 = vadd.f32 %v1627, %v1636
    %v1641 = vmax.f32 %v1639, 0.0
    %v1642 = vmax.f32 %v1640, 0.0
    %v1643 = vpack.c.bf16 %v1641, %v1641
    %v1644 = vpack.c.bf16 %v1642, %v1642
    %s1645 = smul.u32 4, 32
    %s1646 = smul.u32 %s1645, 2
    %s1647 = sshll.u32 %s1646, 4
    %1648 = dma.done [#allocation5], %s1647
    %v1649 = vld [vmem:[#allocation2] sm:$0xff]
    %v1650 = vld [vmem:[#allocation2 + $0x8] sm:$0xff]
    %v1651 = vld [vmem:[#allocation2 + $0x10] sm:$0xff]
    %v1652 = vld [vmem:[#allocation2 + $0x18] sm:$0xff]
    %v1653 = vld [vmem:[#allocation2 + $0x20] sm:$0xff]
    %v1654 = vld [vmem:[#allocation2 + $0x28] sm:$0xff]
    %v1655 = vld [vmem:[#allocation2 + $0x30] sm:$0xff]
    %v1656 = vld [vmem:[#allocation2 + $0x38] sm:$0xff]
    %v1657 = vld [vmem:[#allocation2 + $0x40] sm:$0xff]
    %v1658 = vld [vmem:[#allocation2 + $0x48] sm:$0xff]
    %v1659 = vld [vmem:[#allocation2 + $0x50] sm:$0xff]
    %v1660 = vld [vmem:[#allocation2 + $0x58] sm:$0xff]
    %v1661 = vld [vmem:[#allocation2 + $0x60] sm:$0xff]
    %v1662 = vld [vmem:[#allocation2 + $0x68] sm:$0xff]
    %v1663 = vld [vmem:[#allocation2 + $0x70] sm:$0xff]
    %v1664 = vld [vmem:[#allocation2 + $0x78] sm:$0xff]
    %v1665 = vld [vmem:[#allocation2 + $0x80] sm:$0xff]
    %v1666 = vld [vmem:[#allocation2 + $0x88] sm:$0xff]
    %v1667 = vld [vmem:[#allocation2 + $0x90] sm:$0xff]
    %v1668 = vld [vmem:[#allocation2 + $0x98] sm:$0xff]
    %v1669 = vld [vmem:[#allocation2 + $0xa0] sm:$0xff]
    %v1670 = vld [vmem:[#allocation2 + $0xa8] sm:$0xff]
    %v1671 = vld [vmem:[#allocation2 + $0xb0] sm:$0xff]
    %v1672 = vld [vmem:[#allocation2 + $0xb8] sm:$0xff]
    %v1673 = vld [vmem:[#allocation2 + $0xc0] sm:$0xff]
    %v1674 = vld [vmem:[#allocation2 + $0xc8] sm:$0xff]
    %v1675 = vld [vmem:[#allocation2 + $0xd0] sm:$0xff]
    %v1676 = vld [vmem:[#allocation2 + $0xd8] sm:$0xff]
    %v1677 = vld [vmem:[#allocation2 + $0xe0] sm:$0xff]
    %v1678 = vld [vmem:[#allocation2 + $0xe8] sm:$0xff]
    %v1679 = vld [vmem:[#allocation2 + $0xf0] sm:$0xff]
    %v1680 = vld [vmem:[#allocation2 + $0xf8] sm:$0xff]
    %1681 = vmatprep.subr.bf16.mxu0 %v1650
    %1682 = vmatpush1.bf16.msra.mxu0 %v1649
    %1683 = vmatprep.subr.bf16.mxu0 %v1652
    %1684 = vmatpush1.bf16.msra.mxu0 %v1651
    %1685 = vmatprep.subr.bf16.mxu0 %v1654
    %1686 = vmatpush1.bf16.msra.mxu0 %v1653
    %1687 = vmatprep.subr.bf16.mxu0 %v1656
    %1688 = vmatpush1.bf16.msra.mxu0 %v1655
    %1689 = vmatprep.subr.bf16.mxu0 %v1658
    %1690 = vmatpush1.bf16.msra.mxu0 %v1657
    %1691 = vmatprep.subr.bf16.mxu0 %v1660
    %1692 = vmatpush1.bf16.msra.mxu0 %v1659
    %1693 = vmatprep.subr.bf16.mxu0 %v1662
    %1694 = vmatpush1.bf16.msra.mxu0 %v1661
    %1695 = vmatprep.subr.bf16.mxu0 %v1664
    %1696 = vmatpush1.bf16.msra.mxu0 %v1663
    %1697 = vmatprep.subr.bf16.mxu0 %v1666
    %1698 = vmatpush1.bf16.msra.mxu0 %v1665
    %1699 = vmatprep.subr.bf16.mxu0 %v1668
    %1700 = vmatpush1.bf16.msra.mxu0 %v1667
    %1701 = vmatprep.subr.bf16.mxu0 %v1670
    %1702 = vmatpush1.bf16.msra.mxu0 %v1669
    %1703 = vmatprep.subr.bf16.mxu0 %v1672
    %1704 = vmatpush1.bf16.msra.mxu0 %v1671
    %1705 = vmatprep.subr.bf16.mxu0 %v1674
    %1706 = vmatpush1.bf16.msra.mxu0 %v1673
    %1707 = vmatprep.subr.bf16.mxu0 %v1676
    %1708 = vmatpush1.bf16.msra.mxu0 %v1675
    %1709 = vmatprep.subr.bf16.mxu0 %v1678
    %1710 = vmatpush1.bf16.msra.mxu0 %v1677
    %1711 = vmatprep.subr.bf16.mxu0 %v1680
    %1712 = vmatpush1.bf16.msra.mxu0 %v1679
    %1713 = vmatprep.mubr.bf16.mxu0 %v1644
    %1714 = vmatmul.mubr.bf16.gmra.mrb[0].mxu0 %v1643
    %v1715 = vpop.f32.mrb[0].mxu0
    %v1716 = vadd.f32 0.0, %v1715
    %v1717 = vpop.f32.mrb[0].mxu0
    %v1718 = vadd.f32 0.0, %v1717
    %v1719 = vpop.f32.mrb[0].mxu0
    %v1720 = vpop.f32.mrb[0].mxu0
    %1721 = vdwg.mxu0
    %v1722 = vrot.slane %v1716, 4
    %v1723 = vadd.f32 %v1716, %v1722
    %v1724 = vrot.slane %v1723, 2
    %v1725 = vadd.f32 %v1723, %v1724
    %v1726 = vrot.slane %v1725, 1
    %v1727 = vadd.f32 %v1725, %v1726
    %v1728 = vrot.slane %v1718, 4
    %v1729 = vadd.f32 %v1718, %v1728
    %v1730 = vrot.slane %v1729, 2
    %v1731 = vadd.f32 %v1729, %v1730
    %v1732 = vrot.slane %v1731, 1
    %v1733 = vadd.f32 %v1731, %v1732
    %v1734 = vmul.f32 %v1727, %v1548
    %v1735 = vmul.f32 %v1733, %v1548
    %v1736 = vsub.f32 %v1716, %v1734
    %v1737 = vsub.f32 %v1718, %v1735
    %v1738 = vmul.f32 %v1736, %v1736
    %v1739 = vmul.f32 %v1737, %v1737
    %v1740 = vrot.slane %v1738, 4
    %v1741 = vadd.f32 %v1738, %v1740
    %v1742 = vrot.slane %v1741, 2
    %v1743 = vadd.f32 %v1741, %v1742
    %v1744 = vrot.slane %v1743, 1
    %v1745 = vadd.f32 %v1743, %v1744
    %v1746 = vrot.slane %v1739, 4
    %v1747 = vadd.f32 %v1739, %v1746
    %v1748 = vrot.slane %v1747, 2
    %v1749 = vadd.f32 %v1747, %v1748
    %v1750 = vrot.slane %v1749, 1
    %v1751 = vadd.f32 %v1749, %v1750
    %v1752 = vmul.f32 %v1745, %v1548
    %v1753 = vmul.f32 %v1751, %v1548
    %v1754 = vld [vmem:[%s4] sm:$0x3]
    %v1755 = vadd.f32 %v1752, 1e-05
    %v1756 = vadd.f32 %v1753, 1e-05
    %v1757 = vrsqrt.pop %v1755
    %v1758 = vrsqrt.pop %v1756
    %v1761 = vcombine.low %v1757, %v1758
    %v1763 = vunpack.c.l.s4 1966171168
    %v1764 = vunpack.c.0.s8 %v1763
    %v1765 = vlaneseq
    %v1766 = vshrl.u32 %v1765, 7
    %v1767 = vsub.s32 %v1764, %v1766
    %v1768 = vrot.slane %v1761, %v1767
    %v1770 = vunpack.c.l.s4 1966171168
    %v1771 = vunpack.c.0.s8 %v1770
    %v1772 = vlaneseq
    %v1773 = vshrl.u32 %v1772, 7
    %v1774 = vsub.s32 %v1771, %v1773
    %v1775 = vrot.slane %v1768, %v1774
    %v1777 = vmul.f32 %v1754, %v1775
    %v1778 = vld [vmem:[%s5] sm:$0x3]
    %v1780 = vlaneseq
    %v1781 = vshrl.u32 %v1780, 7
    %v1782 = vsub.s32 0, %v1781
    %v1783 = vrot.slane %v1777, %v1782
    %v1784 = vlaneseq
    %v1785 = vshrl.u32 %v1784, 7
    %v1786 = vsub.s32 1, %v1785
    %v1787 = vrot.slane %v1777, %v1786
    %v1790 = vmul.f32 %v1734, %v1783
    %v1791 = vmul.f32 %v1735, %v1787
    %v1794 = vcombine.low %v1790, %v1791
    %v1796 = vunpack.c.l.s4 1966171168
    %v1797 = vunpack.c.0.s8 %v1796
    %v1798 = vlaneseq
    %v1799 = vshrl.u32 %v1798, 7
    %v1800 = vsub.s32 %v1797, %v1799
    %v1801 = vrot.slane %v1794, %v1800
    %v1803 = vunpack.c.l.s4 1966171168
    %v1804 = vunpack.c.0.s8 %v1803
    %v1805 = vlaneseq
    %v1806 = vshrl.u32 %v1805, 7
    %v1807 = vsub.s32 %v1804, %v1806
    %v1808 = vrot.slane %v1801, %v1807
    %v1810 = vsub.f32 %v1778, %v1808
    %v1811 = vmul.f32 %v1716, %v1783
    %v1812 = vmul.f32 %v1718, %v1787
    %v1814 = vlaneseq
    %v1815 = vshrl.u32 %v1814, 7
    %v1816 = vsub.s32 0, %v1815
    %v1817 = vrot.slane %v1810, %v1816
    %v1818 = vlaneseq
    %v1819 = vshrl.u32 %v1818, 7
    %v1820 = vsub.s32 1, %v1819
    %v1821 = vrot.slane %v1810, %v1820
    %v1824 = vadd.f32 %v1811, %v1817
    %v1825 = vadd.f32 %v1812, %v1821
    %v1826 = vmax.f32 %v1824, 0.0
    %v1827 = vmax.f32 %v1825, 0.0
    %v1828 = vpack.c.bf16 %v1826, %v1826
    %v1829 = vpack.c.bf16 %v1827, %v1827
    %s1830 = sshll.u32 %s1646, 4
    %1831 = dma.done %s354, %s1830
    %v1832 = vld [vmem:[#allocation3] sm:$0xff]
    %v1833 = vld [vmem:[#allocation3 + $0x8] sm:$0xff]
    %v1834 = vld [vmem:[#allocation3 + $0x10] sm:$0xff]
    %v1835 = vld [vmem:[#allocation3 + $0x18] sm:$0xff]
    %v1836 = vld [vmem:[#allocation3 + $0x20] sm:$0xff]
    %v1837 = vld [vmem:[#allocation3 + $0x28] sm:$0xff]
    %v1838 = vld [vmem:[#allocation3 + $0x30] sm:$0xff]
    %v1839 = vld [vmem:[#allocation3 + $0x38] sm:$0xff]
    %v1840 = vld [vmem:[#allocation3 + $0x40] sm:$0xff]
    %v1841 = vld [vmem:[#allocation3 + $0x48] sm:$0xff]
    %v1842 = vld [vmem:[#allocation3 + $0x50] sm:$0xff]
    %v1843 = vld [vmem:[#allocation3 + $0x58] sm:$0xff]
    %v1844 = vld [vmem:[#allocation3 + $0x60] sm:$0xff]
    %v1845 = vld [vmem:[#allocation3 + $0x68] sm:$0xff]
    %v1846 = vld [vmem:[#allocation3 + $0x70] sm:$0xff]
    %v1847 = vld [vmem:[#allocation3 + $0x78] sm:$0xff]
    %v1848 = vld [vmem:[#allocation3 + $0x80] sm:$0xff]
    %v1849 = vld [vmem:[#allocation3 + $0x88] sm:$0xff]
    %v1850 = vld [vmem:[#allocation3 + $0x90] sm:$0xff]
    %v1851 = vld [vmem:[#allocation3 + $0x98] sm:$0xff]
    %v1852 = vld [vmem:[#allocation3 + $0xa0] sm:$0xff]
    %v1853 = vld [vmem:[#allocation3 + $0xa8] sm:$0xff]
    %v1854 = vld [vmem:[#allocation3 + $0xb0] sm:$0xff]
    %v1855 = vld [vmem:[#allocation3 + $0xb8] sm:$0xff]
    %v1856 = vld [vmem:[#allocation3 + $0xc0] sm:$0xff]
    %v1857 = vld [vmem:[#allocation3 + $0xc8] sm:$0xff]
    %v1858 = vld [vmem:[#allocation3 + $0xd0] sm:$0xff]
    %v1859 = vld [vmem:[#allocation3 + $0xd8] sm:$0xff]
    %v1860 = vld [vmem:[#allocation3 + $0xe0] sm:$0xff]
    %v1861 = vld [vmem:[#allocation3 + $0xe8] sm:$0xff]
    %v1862 = vld [vmem:[#allocation3 + $0xf0] sm:$0xff]
    %v1863 = vld [vmem:[#allocation3 + $0xf8] sm:$0xff]
    %1864 = vmatprep.subr.bf16.mxu0 %v1833
    %1865 = vmatpush1.bf16.msra.mxu0 %v1832
    %1866 = vmatprep.subr.bf16.mxu0 %v1835
    %1867 = vmatpush1.bf16.msra.mxu0 %v1834
    %1868 = vmatprep.subr.bf16.mxu0 %v1837
    %1869 = vmatpush1.bf16.msra.mxu0 %v1836
    %1870 = vmatprep.subr.bf16.mxu0 %v1839
    %1871 = vmatpush1.bf16.msra.mxu0 %v1838
    %1872 = vmatprep.subr.bf16.mxu0 %v1841
    %1873 = vmatpush1.bf16.msra.mxu0 %v1840
    %1874 = vmatprep.subr.bf16.mxu0 %v1843
    %1875 = vmatpush1.bf16.msra.mxu0 %v1842
    %1876 = vmatprep.subr.bf16.mxu0 %v1845
    %1877 = vmatpush1.bf16.msra.mxu0 %v1844
    %1878 = vmatprep.subr.bf16.mxu0 %v1847
    %1879 = vmatpush1.bf16.msra.mxu0 %v1846
    %1880 = vmatprep.subr.bf16.mxu0 %v1849
    %1881 = vmatpush1.bf16.msra.mxu0 %v1848
    %1882 = vmatprep.subr.bf16.mxu0 %v1851
    %1883 = vmatpush1.bf16.msra.mxu0 %v1850
    %1884 = vmatprep.subr.bf16.mxu0 %v1853
    %1885 = vmatpush1.bf16.msra.mxu0 %v1852
    %1886 = vmatprep.subr.bf16.mxu0 %v1855
    %1887 = vmatpush1.bf16.msra.mxu0 %v1854
    %1888 = vmatprep.subr.bf16.mxu0 %v1857
    %1889 = vmatpush1.bf16.msra.mxu0 %v1856
    %1890 = vmatprep.subr.bf16.mxu0 %v1859
    %1891 = vmatpush1.bf16.msra.mxu0 %v1858
    %1892 = vmatprep.subr.bf16.mxu0 %v1861
    %1893 = vmatpush1.bf16.msra.mxu0 %v1860
    %1894 = vmatprep.subr.bf16.mxu0 %v1863
    %1895 = vmatpush1.bf16.msra.mxu0 %v1862
    %1896 = vmatprep.mubr.bf16.mxu0 %v1829
    %1897 = vmatmul.mubr.bf16.gmra.mrb[0].mxu0 %v1828
    %v1898 = vpop.f32.mrb[0].mxu0
    %v1899 = vadd.f32 0.0, %v1898
    %v1900 = vpop.f32.mrb[0].mxu0
    %v1901 = vadd.f32 0.0, %v1900
    %v1902 = vpop.f32.mrb[0].mxu0
    %v1903 = vpop.f32.mrb[0].mxu0
    %1904 = vdwg.mxu0
    %v1905 = vrot.slane %v1899, 4
    %v1906 = vadd.f32 %v1899, %v1905
    %v1907 = vrot.slane %v1906, 2
    %v1908 = vadd.f32 %v1906, %v1907
    %v1909 = vrot.slane %v1908, 1
    %v1910 = vadd.f32 %v1908, %v1909
    %v1911 = vrot.slane %v1901, 4
    %v1912 = vadd.f32 %v1901, %v1911
    %v1913 = vrot.slane %v1912, 2
    %v1914 = vadd.f32 %v1912, %v1913
    %v1915 = vrot.slane %v1914, 1
    %v1916 = vadd.f32 %v1914, %v1915
    %v1917 = vmul.f32 %v1910, %v1548
    %v1918 = vmul.f32 %v1916, %v1548
    %v1919 = vsub.f32 %v1899, %v1917
    %v1920 = vsub.f32 %v1901, %v1918
    %v1921 = vmul.f32 %v1919, %v1919
    %v1922 = vmul.f32 %v1920, %v1920
    %v1923 = vrot.slane %v1921, 4
    %v1924 = vadd.f32 %v1921, %v1923
    %v1925 = vrot.slane %v1924, 2
    %v1926 = vadd.f32 %v1924, %v1925
    %v1927 = vrot.slane %v1926, 1
    %v1928 = vadd.f32 %v1926, %v1927
    %v1929 = vrot.slane %v1922, 4
    %v1930 = vadd.f32 %v1922, %v1929
    %v1931 = vrot.slane %v1930, 2
    %v1932 = vadd.f32 %v1930, %v1931
    %v1933 = vrot.slane %v1932, 1
    %v1934 = vadd.f32 %v1932, %v1933
    %v1935 = vmul.f32 %v1928, %v1548
    %v1936 = vmul.f32 %v1934, %v1548
    %v1937 = vld [vmem:[%s6] sm:$0x3]
    %v1938 = vadd.f32 %v1935, 1e-05
    %v1939 = vadd.f32 %v1936, 1e-05
    %v1940 = vrsqrt.pop %v1938
    %v1941 = vrsqrt.pop %v1939
    %v1944 = vcombine.low %v1940, %v1941
    %v1946 = vunpack.c.l.s4 1966171168
    %v1947 = vunpack.c.0.s8 %v1946
    %v1948 = vlaneseq
    %v1949 = vshrl.u32 %v1948, 7
    %v1950 = vsub.s32 %v1947, %v1949
    %v1951 = vrot.slane %v1944, %v1950
    %v1953 = vunpack.c.l.s4 1966171168
    %v1954 = vunpack.c.0.s8 %v1953
    %v1955 = vlaneseq
    %v1956 = vshrl.u32 %v1955, 7
    %v1957 = vsub.s32 %v1954, %v1956
    %v1958 = vrot.slane %v1951, %v1957
    %v1960 = vmul.f32 %v1937, %v1958
    %v1961 = vld [vmem:[%s7] sm:$0x3]
    %v1963 = vlaneseq
    %v1964 = vshrl.u32 %v1963, 7
    %v1965 = vsub.s32 0, %v1964
    %v1966 = vrot.slane %v1960, %v1965
    %v1967 = vlaneseq
    %v1968 = vshrl.u32 %v1967, 7
    %v1969 = vsub.s32 1, %v1968
    %v1970 = vrot.slane %v1960, %v1969
    %v1973 = vmul.f32 %v1917, %v1966
    %v1974 = vmul.f32 %v1918, %v1970
    %v1977 = vcombine.low %v1973, %v1974
    %v1979 = vunpack.c.l.s4 1966171168
    %v1980 = vunpack.c.0.s8 %v1979
    %v1981 = vlaneseq
    %v1982 = vshrl.u32 %v1981, 7
    %v1983 = vsub.s32 %v1980, %v1982
    %v1984 = vrot.slane %v1977, %v1983
    %v1986 = vunpack.c.l.s4 1966171168
    %v1987 = vunpack.c.0.s8 %v1986
    %v1988 = vlaneseq
    %v1989 = vshrl.u32 %v1988, 7
    %v1990 = vsub.s32 %v1987, %v1989
    %v1991 = vrot.slane %v1984, %v1990
    %v1993 = vsub.f32 %v1961, %v1991
    %v1994 = vmul.f32 %v1899, %v1966
    %v1995 = vmul.f32 %v1901, %v1970
    %v1997 = vlaneseq
    %v1998 = vshrl.u32 %v1997, 7
    %v1999 = vsub.s32 0, %v1998
    %v2000 = vrot.slane %v1993, %v1999
    %v2001 = vlaneseq
    %v2002 = vshrl.u32 %v2001, 7
    %v2003 = vsub.s32 1, %v2002
    %v2004 = vrot.slane %v1993, %v2003
    %v2007 = vadd.f32 %v1994, %v2000
    %v2008 = vadd.f32 %v1995, %v2004
    %v2009 = vmax.f32 %v2007, 0.0
    %v2010 = vmax.f32 %v2008, 0.0
    %v2011 = vpack.c.bf16 %v2009, %v2009
    %v2012 = vpack.c.bf16 %v2010, %v2010
    %s2013 = smul.u32 %s1645, 1
    %s2014 = sshll.u32 %s2013, 4
    %2015 = dma.done %s659, %s2014
    %v2016 = vld [vmem:[#allocation4] sm:$0xff]
    %v2017 = vld [vmem:[#allocation4 + $0x8] sm:$0xff]
    %v2018 = vld [vmem:[#allocation4 + $0x10] sm:$0xff]
    %v2019 = vld [vmem:[#allocation4 + $0x18] sm:$0xff]
    %v2020 = vld [vmem:[#allocation4 + $0x20] sm:$0xff]
    %v2021 = vld [vmem:[#allocation4 + $0x28] sm:$0xff]
    %v2022 = vld [vmem:[#allocation4 + $0x30] sm:$0xff]
    %v2023 = vld [vmem:[#allocation4 + $0x38] sm:$0xff]
    %v2024 = vld [vmem:[#allocation4 + $0x40] sm:$0xff]
    %v2025 = vld [vmem:[#allocation4 + $0x48] sm:$0xff]
    %v2026 = vld [vmem:[#allocation4 + $0x50] sm:$0xff]
    %v2027 = vld [vmem:[#allocation4 + $0x58] sm:$0xff]
    %v2028 = vld [vmem:[#allocation4 + $0x60] sm:$0xff]
    %v2029 = vld [vmem:[#allocation4 + $0x68] sm:$0xff]
    %v2030 = vld [vmem:[#allocation4 + $0x70] sm:$0xff]
    %v2031 = vld [vmem:[#allocation4 + $0x78] sm:$0xff]
    %v2032 = vld [vmem:[%s8] sm:$0x1]
    %v2034 = vlaneseq
    %v2035 = vshrl.u32 %v2034, 7
    %v2036 = vsub.s32 0, %v2035
    %v2037 = vrot.slane %v2032, %v2036
    %2039 = vmatprep.subr.bf16.mxu0 0
    %2040 = vmatpush1.bf16.msra.mxu0 %v2016
    %2041 = vmatprep.subr.bf16.mxu0 0
    %2042 = vmatpush1.bf16.msra.mxu0 %v2017
    %2043 = vmatprep.subr.bf16.mxu0 0
    %2044 = vmatpush1.bf16.msra.mxu0 %v2018
    %2045 = vmatprep.subr.bf16.mxu0 0
    %2046 = vmatpush1.bf16.msra.mxu0 %v2019
    %2047 = vmatprep.subr.bf16.mxu0 0
    %2048 = vmatpush1.bf16.msra.mxu0 %v2020
    %2049 = vmatprep.subr.bf16.mxu0 0
    %2050 = vmatpush1.bf16.msra.mxu0 %v2021
    %2051 = vmatprep.subr.bf16.mxu0 0
    %2052 = vmatpush1.bf16.msra.mxu0 %v2022
    %2053 = vmatprep.subr.bf16.mxu0 0
    %2054 = vmatpush1.bf16.msra.mxu0 %v2023
    %2055 = vmatprep.subr.bf16.mxu0 0
    %2056 = vmatpush1.bf16.msra.mxu0 %v2024
    %2057 = vmatprep.subr.bf16.mxu0 0
    %2058 = vmatpush1.bf16.msra.mxu0 %v2025
    %2059 = vmatprep.subr.bf16.mxu0 0
    %2060 = vmatpush1.bf16.msra.mxu0 %v2026
    %2061 = vmatprep.subr.bf16.mxu0 0
    %2062 = vmatpush1.bf16.msra.mxu0 %v2027
    %2063 = vmatprep.subr.bf16.mxu0 0
    %2064 = vmatpush1.bf16.msra.mxu0 %v2028
    %2065 = vmatprep.subr.bf16.mxu0 0
    %2066 = vmatpush1.bf16.msra.mxu0 %v2029
    %2067 = vmatprep.subr.bf16.mxu0 0
    %2068 = vmatpush1.bf16.msra.mxu0 %v2030
    %2069 = vmatprep.subr.bf16.mxu0 0
    %2070 = vmatpush1.bf16.msra.mxu0 %v2031
    %2071 = vmatprep.mubr.bf16.mxu0 %v2012
    %2072 = vmatmul.mubr.bf16.gmra.mrb[0].mxu0 %v2011
    %v2073 = vpop.f32.mrb[0].mxu0
    %v2074 = vadd.f32 %v2037, %v2073
    %v2075 = vpop.f32.mrb[0].mxu0
    %v2076 = vpop.f32.mrb[0].mxu0
    %v2077 = vpop.f32.mrb[0].mxu0
    %2078 = vdwg.mxu0
    %2079 = vst [vmem:[%s12] sm:$0xff] %v2074
    // Predicated region
    $region120: #{simple_encoder_pallas.1} parent=1 // pred_check
      _
    $region121: #{simple_encoder_pallas.1} parent=1 // pred_check_branch
      %2081 = sbr.rel (0) target = $region123
    $region122: #{simple_encoder_pallas.1} parent=1 // pred_region
      _
    $region123: #{simple_encoder_pallas.1} parent=1 // pred_fallthru
      _
    // Predicated region
    $region124: #{simple_encoder_pallas.1} parent=1 // pred_check
      _
    $region125: #{simple_encoder_pallas.1} parent=1 // pred_check_branch
      %2083 = sbr.rel (0) target = $region127
    $region126: #{simple_encoder_pallas.1} parent=1 // pred_region
      _
    $region127: #{simple_encoder_pallas.1} parent=1 // pred_fallthru
      _
    %2084 = vsyncpa [#allocation7], 1
  %2085 = vsyncmov [#allocation5]
  %s2086 = vpop.sfrf %2085
  %p2087 = scmp.eq.s32.totalorder %s2086, 0
  %p2088 = pneg %p2087
  %2090 = shalt.err (%p2088)
  %s2091 = scalar_lea.sflag [#allocation5], 1
  %2092 = vsyncmov %s2091
  %s2093 = vpop.sfrf %2092
  %p2094 = scmp.eq.s32.totalorder %s2093, 0
  %p2095 = pneg %p2094
  %2097 = shalt.err (%p2095)
  %s2098 = scalar_lea.sflag [#allocation5], 2
  %2099 = vsyncmov %s2098
  %s2100 = vpop.sfrf %2099
  %p2101 = scmp.eq.s32.totalorder %s2100, 0
  %p2102 = pneg %p2101
  %2104 = shalt.err (%p2102)

</llo_original>
